<compile_context>
chip_gen: v7x
topology: tpu7x:2x2x1
jax: 0.10.0
libtpu: 0.0.40
codegen_flags: <defaults>
</compile_context>

<pallas_src>
import jax
import jax.numpy as jnp
from jax.experimental import pallas as pl
from jax.experimental.pallas import tpu as pltpu


def _round_up(x, m):
    return (x + m - 1) // m * m


def _embed_kernel(x_ref, w_ref, b_ref, alpha_ref, o_ref):
    # x_ref: (TM, K) bf16   flattened NCHW activations (one row tile)
    # w_ref: (K, C_pad) bf16  fused conv1 . conv2 . BN-scale weight
    # b_ref: (1, C_pad) f32   folded BN bias
    # alpha_ref: (1,) f32 in SMEM  shared PReLU slope
    # o_ref: (TM, C_pad) f32
    y = jnp.dot(x_ref[...], w_ref[...], preferred_element_type=jnp.float32)
    y = y + b_ref[...]
    alpha = alpha_ref[0]
    o_ref[...] = jnp.where(y > 0.0, y, alpha * y)


def embed_block(x, w1, w2, gamma, beta, run_mean, run_var, prelu_alpha,
                group_size=32, eps=1e-5, row_tile=256):
    N, C, H, W = x.shape
    G = C // group_size
    Cg = group_size
    KH, KW = w1.shape[2], w1.shape[3]
    assert H == KH and W == KW, "valid 8x8 conv => input spatial must equal kernel"
    Kg = Cg * KH * KW
    K = C * KH * KW

    f32 = jnp.float32

    # ---------- host-side (static) weight fusion ----------
    # conv2 torch layout (C_out, C_in, 1, 1) -> (C_in, C_out)
    w2_t = w2.reshape(C, C).astype(f32).T
    # eval-mode BatchNorm folded affine
    inv_std = jax.lax.rsqrt(run_var.astype(f32) + eps)
    scale = gamma.astype(f32) * inv_std                       # (C,)
    bias = beta.astype(f32) - run_mean.astype(f32) * scale    # (C,)
    # conv1 torch layout (C, Cg, KH, KW); group g owns out-channels [g*Cg, (g+1)*Cg)
    w1_g = w1.astype(f32).reshape(G, Cg, Kg).transpose(0, 2, 1)   # (G, Kg, Cg)
    w2_g = w2_t.reshape(G, Cg, C)                                  # (G, Cg, C)
    # block-diag(conv1) @ conv2 : row order matches x.reshape(N, C*KH*KW)
    w_eff = jnp.einsum('gkc,gcd->gkd', w1_g, w2_g).reshape(K, C)   # (K, C)
    w_eff = w_eff * scale[None, :]                                 # fold BN scale

    # ---------- padding for lane-dense output & row tiles ----------
    C_pad = _round_up(C, 128)
    TM = row_tile if N >= row_tile else _round_up(N, 8)
    N_pad = _round_up(N, TM)

    w_pad = jnp.zeros((K, C_pad), f32).at[:, :C].set(w_eff).astype(jnp.bfloat16)
    b_pad = jnp.zeros((1, C_pad), f32).at[0, :C].set(bias)

    x_flat = x.reshape(N, K).astype(jnp.bfloat16)
    if N_pad != N:
        x_flat = jnp.zeros((N_pad, K), jnp.bfloat16).at[:N, :].set(x_flat)

    alpha = prelu_alpha.reshape(-1)[:1].astype(f32)

    grid = (N_pad // TM,)
    out = pl.pallas_call(
        _embed_kernel,
        out_shape=jax.ShapeDtypeStruct((N_pad, C_pad), f32),
        grid_spec=pltpu.PrefetchScalarGridSpec(
            num_scalar_prefetch=0,
            grid=grid,
            in_specs=[
                pl.BlockSpec((TM, K), lambda i: (i, 0)),             # activations
                pl.BlockSpec((K, C_pad), lambda i: (0, 0)),          # fused weight
                pl.BlockSpec((1, C_pad), lambda i: (0, 0)),          # folded BN bias
                pl.BlockSpec(memory_space=pltpu.MemorySpace.SMEM),   # PReLU alpha
            ],
            out_specs=pl.BlockSpec((TM, C_pad), lambda i: (i, 0)),
        ),
        compiler_params=pltpu.CompilerParams(
            dimension_semantics=("parallel",)),
    )(x_flat, w_pad, b_pad, alpha)

    # conv output spatial is 1x1, so flatten(start_dim=1) of (N, C, 1, 1) == (N, C)
    return out[:N, :C]


def embed_block_reference(x, w1, w2, gamma, beta, run_mean, run_var, prelu_alpha,
                          group_size=32, eps=1e-5):
    """Plain-JAX f32 reference (lax.conv) used to validate the kernel."""
    N, C, H, W = x.shape
    G = C // group_size
    y = jax.lax.conv_general_dilated(
        x, w1, window_strides=(1, 1), padding='VALID',
        dimension_numbers=('NCHW', 'OIHW', 'NCHW'), feature_group_count=G)
    y = jax.lax.conv_general_dilated(
        y, w2, window_strides=(1, 1), padding='VALID',
        dimension_numbers=('NCHW', 'OIHW', 'NCHW'))
    rm = run_mean[None, :, None, None]
    rv = run_var[None, :, None, None]
    g_ = gamma[None, :, None, None]
    b_ = beta[None, :, None, None]
    y = (y - rm) / jnp.sqrt(rv + eps) * g_ + b_
    y = jnp.where(y > 0, y, prelu_alpha[0] * y)
    return y.reshape(N, -1)


if __name__ == "__main__":
    # Shape-consistent small config: chan=64, group_size=32 -> groups=2,
    # input spatial 8x8 (required by the valid 8x8 first conv), batch=8.
    chan, group_size = 64, 32
    groups = chan // group_size
    N = 8

    key = jax.random.PRNGKey(0)
    k = jax.random.split(key, 8)
    x = jax.random.normal(k[0], (N, chan, 8, 8), jnp.float32)

    # Deterministic synthetic parameters (shapes from the module __init__).
    w1 = jax.random.normal(k[1], (chan, chan // groups, 8, 8), jnp.float32) * 0.05
    w2 = jax.random.normal(k[2], (chan, chan, 1, 1), jnp.float32) * 0.1
    gamma = 1.0 + 0.1 * jax.random.normal(k[3], (chan,), jnp.float32)
    beta = 0.1 * jax.random.normal(k[4], (chan,), jnp.float32)
    run_mean = 0.1 * jax.random.normal(k[5], (chan,), jnp.float32)
    run_var = jax.random.uniform(k[6], (chan,), jnp.float32, minval=0.5, maxval=1.5)
    prelu_alpha = jnp.array([0.25], jnp.float32)  # nn.PReLU() default

    out = embed_block(x, w1, w2, gamma, beta, run_mean, run_var, prelu_alpha,
                      group_size=group_size)
    out = jax.block_until_ready(out)

    ref = embed_block_reference(x, w1, w2, gamma, beta, run_mean, run_var,
                                prelu_alpha, group_size=group_size)
    assert out.shape == (N, chan), out.shape
    # Tolerance relaxed vs the pure-f32 version because the GEMM operands are
    # cast to bf16 (MXU-native) per the performance review; accumulation is f32.
    max_err = float(jnp.max(jnp.abs(out - ref)))
    assert jnp.allclose(out, ref, atol=1e-1, rtol=5e-2), max_err
    print("KERNEL_OK")
</pallas_src>

<mosaic_0001>
module attributes {stable_mosaic.version = 11 : i64} {
  func.func @_embed_kernel(%arg0: i32, %arg1: memref<8x4096xbf16, #tpu.memory_space<vmem>>, %arg2: memref<4096x128xbf16, #tpu.memory_space<vmem>>, %arg3: memref<1x128xf32, #tpu.memory_space<vmem>>, %arg4: memref<1xf32, #tpu.memory_space<smem>>, %arg5: memref<8x128xf32, #tpu.memory_space<vmem>>) attributes {dimension_semantics = [#tpu.dimension_semantics<parallel>], iteration_bounds = array<i64: 1>, scalar_prefetch = 0 : i64, scratch_operands = 0 : i64, tpu.core_type = #tpu.core_type<tc>, window_params = [{transform_indices = @transform_0, window_bounds = array<i64: 8, 4096>}, {pipeline_mode = #tpu.pipeline_mode<synchronous>, transform_indices = @transform_1, window_bounds = array<i64: 4096, 128>}, {pipeline_mode = #tpu.pipeline_mode<synchronous>, transform_indices = @transform_2, window_bounds = array<i64: 1, 128>}, {transform_indices = @transform_3, window_bounds = array<i64: 1>}, {transform_indices = @transform_4, window_bounds = array<i64: 8, 128>}]} {
    %c0 = arith.constant 0 : index
    %c0_0 = arith.constant 0 : index
    %0 = vector.load %arg1[%c0, %c0_0] : memref<8x4096xbf16, #tpu.memory_space<vmem>>, vector<8x4096xbf16>
    %c0_1 = arith.constant 0 : index
    %c0_2 = arith.constant 0 : index
    %1 = vector.load %arg2[%c0_1, %c0_2] : memref<4096x128xbf16, #tpu.memory_space<vmem>>, vector<4096x128xbf16>
    %cst = arith.constant dense<0.000000e+00> : vector<8x128xf32>
    %2 = tpu.matmul %0, %1, %cst {dimension_numbers = #tpu.dot_dimension_numbers<[1], [0], [0], [1], [0, 0, 1, 1], [], []>} : vector<8x4096xbf16>, vector<4096x128xbf16>, vector<8x128xf32> -> vector<8x128xf32>
    %c0_3 = arith.constant 0 : index
    %c0_4 = arith.constant 0 : index
    %3 = vector.load %arg3[%c0_3, %c0_4] : memref<1x128xf32, #tpu.memory_space<vmem>>, vector<1x128xf32>
    %4 = vector.broadcast %3 : vector<1x128xf32> to vector<8x128xf32>
    %5 = arith.addf %2, %4 : vector<8x128xf32>
    %c0_5 = arith.constant 0 : index
    %6 = memref.load %arg4[%c0_5] : memref<1xf32, #tpu.memory_space<smem>>
    %cst_6 = arith.constant 0.000000e+00 : f32
    %7 = vector.broadcast %cst_6 : f32 to vector<8x128xf32>
    %8 = arith.cmpf ogt, %5, %7 : vector<8x128xf32>
    %9 = vector.broadcast %6 : f32 to vector<8x128xf32>
    %10 = arith.mulf %9, %5 : vector<8x128xf32>
    %11 = arith.select %8, %5, %10 : vector<8x128xi1>, vector<8x128xf32>
    %c0_7 = arith.constant 0 : index
    %c0_8 = arith.constant 0 : index
    %12 = vector.load %arg5[%c0_7, %c0_8] : memref<8x128xf32, #tpu.memory_space<vmem>>, vector<8x128xf32>
    tpu.vector_store %arg5[%c0_7, %c0_8], %11 {strides = array<i32>} : memref<8x128xf32, #tpu.memory_space<vmem>>, vector<8x128xf32>,
    return
  }
  func.func @transform_0(%arg0: i32) -> (i32, i32) {
    %c0_i32 = arith.constant 0 : i32
    %c0_i32_0 = arith.constant 0 : i32
    return %arg0, %c0_i32 : i32, i32
  }
  func.func @transform_1(%arg0: i32) -> (i32, i32) {
    %c0_i32 = arith.constant 0 : i32
    %c0_i32_0 = arith.constant 0 : i32
    %c0_i32_1 = arith.constant 0 : i32
    return %c0_i32, %c0_i32_0 : i32, i32
  }
  func.func @transform_2(%arg0: i32) -> (i32, i32) {
    %c0_i32 = arith.constant 0 : i32
    %c0_i32_0 = arith.constant 0 : i32
    %c0_i32_1 = arith.constant 0 : i32
    return %c0_i32, %c0_i32_0 : i32, i32
  }
  func.func @transform_3(%arg0: i32) -> i32 {
    %c0_i32 = arith.constant 0 : i32
    %c0_i32_0 = arith.constant 0 : i32
    return %c0_i32 : i32
  }
  func.func @transform_4(%arg0: i32) -> (i32, i32) {
    %c0_i32 = arith.constant 0 : i32
    %c0_i32_0 = arith.constant 0 : i32
    return %arg0, %c0_i32 : i32, i32
  }
}

</mosaic_0001>

<llo_original>
// kernel: tpu_custom_call.1
$region0: #{tpu_custom_call.1}
  #allocation0 [shape = 'u32[]', space=smem, size = 0x4, offset = 0x4, fixed_abs, tag = 'smem constant byte address 0x4 - core index']
  #allocation1 [shape = 'u32[144,128]{1,0:T(1,128)}', space=vmem, size = 0x12000, scoped, tag = 'internal scratch']
  #allocation2 [shape = 'f32[1]{0:T(128)S(6)}', space=smem, size = 0x200, scoped, tag = 'scoped memory for tpu_custom_call.1']
  %s0 = inlined_call_operand.hbm [shape: bf16[8,4096], index: 0, kind: input, shape index: {}]
  %s1 = inlined_call_operand.hbm [shape: bf16[4096,128], index: 1, kind: input, shape index: {}]
  %s2 = inlined_call_operand.vmem [shape: f32[1,128], index: 2, kind: input, shape index: {}]
  %s3 = inlined_call_operand.<no memory space> [shape: f32[1], index: 3, kind: input, shape index: {}]
  %s4 = inlined_call_operand.hbm [shape: f32[8,128], index: 4, kind: output, shape index: {}]
  %s5 = sld [smem:[#allocation0]]
  $region34: #{tpu_custom_call.1} parent=0
    _
  %s7 = ssub.s32 1, %s5
  %s8 = scalar_select 0, %s7, %s5
  %9 = sst [smem:[#allocation2]] %s3
  $region1: #{tpu_custom_call.1} parent=0
    #allocation3 [shape = 'u8[65536]{0}', space=vmem, size = 0x10000, scoped, tag = 'input window, operand 0, single buffered']
    #allocation4 [shape = 's32[1]{0}', space=sflag, size = 0x4, scoped, tag = 'scoped memory for tpu_custom_call.1']
    #allocation5 [shape = 's32[1]{0}', space=sflag, size = 0x4, scoped, tag = 'scoped memory for tpu_custom_call.1']
    #allocation6 [shape = 'u8[1048576]{0}', space=vmem, size = 0x100000, scoped, tag = 'input window, operand 1, single buffered']
    #allocation7 [shape = 's32[1]{0}', space=sflag, size = 0x4, scoped, tag = 'scoped memory for tpu_custom_call.1']
    #allocation8 [shape = 'u8[4096]{0}', space=vmem, size = 0x1000, scoped, tag = 'output window, operand 0, single buffered']
    %10 = vsyncpa [#allocation4], 0
    %11 = vsyncpa [#allocation7], 0
    %12 = vsyncpa [#allocation5], 0
    // Predicated region
    $region2: #{tpu_custom_call.1} parent=1 // pred_check
      _
    $region3: #{tpu_custom_call.1} parent=1 // pred_check_branch
      %14 = sbr.rel (0) target = $region5
    $region4: #{tpu_custom_call.1} parent=1 // pred_region
      %s16 = ssub.s32 2048, 2048
      %17 = vsyncadd [#allocation4], %s16
      %s19 = sshll.u32 [#allocation3], 4
      %s20 = int_to_ptr.vmem [resolvable:$true] %s19
      %22 = dma.hbm_to_vmem [thread:$0]  %s0, 2048, %s20, [#allocation4]
    $region5: #{tpu_custom_call.1} parent=1 // pred_fallthru
      _
    // Predicated region
    $region6: #{tpu_custom_call.1} parent=1 // pred_check
      _
    $region7: #{tpu_custom_call.1} parent=1 // pred_check_branch
      %24 = sbr.rel (0) target = $region9
    $region8: #{tpu_custom_call.1} parent=1 // pred_region
      %s26 = ssub.s32 32768, 32768
      %27 = vsyncadd [#allocation7], %s26
      %s28 = sshll.u32 [#allocation6], 4
      %s29 = int_to_ptr.vmem [resolvable:$true] %s28
      %34 = dma.hbm_to_vmem [thread:$0]  %s1, 32768, %s29, [#allocation7], 64, 64, 4
    $region9: #{tpu_custom_call.1} parent=1 // pred_fallthru
      _
    // Predicated region
    $region10: #{tpu_custom_call.1} parent=1 // pred_check
      _
    $region11: #{tpu_custom_call.1} parent=1 // pred_check_branch
      %36 = sbr.rel (0) target = $region13
    $region12: #{tpu_custom_call.1} parent=1 // pred_region
      _
    $region13: #{tpu_custom_call.1} parent=1 // pred_fallthru
      _
    // Predicated region
    $region14: #{tpu_custom_call.1} parent=1 // pred_check
      _
    $region15: #{tpu_custom_call.1} parent=1 // pred_check_branch
      %38 = sbr.rel (0) target = $region17
    $region16: #{tpu_custom_call.1} parent=1 // pred_region
      _
    $region17: #{tpu_custom_call.1} parent=1 // pred_fallthru
      _
    // Predicated region
    $region18: #{tpu_custom_call.1} parent=1 // pred_check
      _
    $region19: #{tpu_custom_call.1} parent=1 // pred_check_branch
      %40 = sbr.rel (0) target = $region21
    $region20: #{tpu_custom_call.1} parent=1 // pred_region
      %41 = dma.done [#allocation4], 2048
    $region21: #{tpu_custom_call.1} parent=1 // pred_fallthru
      _
    // Predicated region
    $region22: #{tpu_custom_call.1} parent=1 // pred_check
      _
    $region23: #{tpu_custom_call.1} parent=1 // pred_check_branch
      %43 = sbr.rel (0) target = $region25
    $region24: #{tpu_custom_call.1} parent=1 // pred_region
      %44 = dma.done [#allocation7], 32768
    $region25: #{tpu_custom_call.1} parent=1 // pred_fallthru
      _
    %v46 = vld [vmem:[#allocation3] sm:$0xff]
    %v47 = vld [vmem:[#allocation3 + $0x8] sm:$0xff]
    %v48 = vld [vmem:[#allocation3 + $0x10] sm:$0xff]
    %v49 = vld [vmem:[#allocation3 + $0x18] sm:$0xff]
    %v50 = vld [vmem:[#allocation3 + $0x20] sm:$0xff]
    %v51 = vld [vmem:[#allocation3 + $0x28] sm:$0xff]
    %v52 = vld [vmem:[#allocation3 + $0x30] sm:$0xff]
    %v53 = vld [vmem:[#allocation3 + $0x38] sm:$0xff]
    %v54 = vld [vmem:[#allocation3 + $0x40] sm:$0xff]
    %v55 = vld [vmem:[#allocation3 + $0x48] sm:$0xff]
    %v56 = vld [vmem:[#allocation3 + $0x50] sm:$0xff]
    %v57 = vld [vmem:[#allocation3 + $0x58] sm:$0xff]
    %v58 = vld [vmem:[#allocation3 + $0x60] sm:$0xff]
    %v59 = vld [vmem:[#allocation3 + $0x68] sm:$0xff]
    %v60 = vld [vmem:[#allocation3 + $0x70] sm:$0xff]
    %v61 = vld [vmem:[#allocation3 + $0x78] sm:$0xff]
    %v62 = vld [vmem:[#allocation6] sm:$0xf]
    %v63 = vld [vmem:[#allocation6 + $0x4] sm:$0xf]
    %v64 = vld [vmem:[#allocation6 + $0x8] sm:$0xf]
    %v65 = vld [vmem:[#allocation6 + $0xc] sm:$0xf]
    %v66 = vld [vmem:[#allocation6 + $0x10] sm:$0xf]
    %v67 = vld [vmem:[#allocation6 + $0x14] sm:$0xf]
    %v68 = vld [vmem:[#allocation6 + $0x18] sm:$0xf]
    %v69 = vld [vmem:[#allocation6 + $0x1c] sm:$0xf]
    %v70 = vld [vmem:[#allocation6 + $0x20] sm:$0xf]
    %v71 = vld [vmem:[#allocation6 + $0x24] sm:$0xf]
    %v72 = vld [vmem:[#allocation6 + $0x28] sm:$0xf]
    %v73 = vld [vmem:[#allocation6 + $0x2c] sm:$0xf]
    %v74 = vld [vmem:[#allocation6 + $0x30] sm:$0xf]
    %v75 = vld [vmem:[#allocation6 + $0x34] sm:$0xf]
    %v76 = vld [vmem:[#allocation6 + $0x38] sm:$0xf]
    %v77 = vld [vmem:[#allocation6 + $0x3c] sm:$0xf]
    %v78 = vld [vmem:[#allocation6 + $0x40] sm:$0xf]
    %v79 = vld [vmem:[#allocation6 + $0x44] sm:$0xf]
    %v80 = vld [vmem:[#allocation6 + $0x48] sm:$0xf]
    %v81 = vld [vmem:[#allocation6 + $0x4c] sm:$0xf]
    %v82 = vld [vmem:[#allocation6 + $0x50] sm:$0xf]
    %v83 = vld [vmem:[#allocation6 + $0x54] sm:$0xf]
    %v84 = vld [vmem:[#allocation6 + $0x58] sm:$0xf]
    %v85 = vld [vmem:[#allocation6 + $0x5c] sm:$0xf]
    %v86 = vld [vmem:[#allocation6 + $0x60] sm:$0xf]
    %v87 = vld [vmem:[#allocation6 + $0x64] sm:$0xf]
    %v88 = vld [vmem:[#allocation6 + $0x68] sm:$0xf]
    %v89 = vld [vmem:[#allocation6 + $0x6c] sm:$0xf]
    %v90 = vld [vmem:[#allocation6 + $0x70] sm:$0xf]
    %v91 = vld [vmem:[#allocation6 + $0x74] sm:$0xf]
    %v92 = vld [vmem:[#allocation6 + $0x78] sm:$0xf]
    %v93 = vld [vmem:[#allocation6 + $0x7c] sm:$0xf]
    %v94 = vld [vmem:[#allocation6 + $0x80] sm:$0xf]
    %v95 = vld [vmem:[#allocation6 + $0x84] sm:$0xf]
    %v96 = vld [vmem:[#allocation6 + $0x88] sm:$0xf]
    %v97 = vld [vmem:[#allocation6 + $0x8c] sm:$0xf]
    %v98 = vld [vmem:[#allocation6 + $0x90] sm:$0xf]
    %v99 = vld [vmem:[#allocation6 + $0x94] sm:$0xf]
    %v100 = vld [vmem:[#allocation6 + $0x98] sm:$0xf]
    %v101 = vld [vmem:[#allocation6 + $0x9c] sm:$0xf]
    %v102 = vld [vmem:[#allocation6 + $0xa0] sm:$0xf]
    %v103 = vld [vmem:[#allocation6 + $0xa4] sm:$0xf]
    %v104 = vld [vmem:[#allocation6 + $0xa8] sm:$0xf]
    %v105 = vld [vmem:[#allocation6 + $0xac] sm:$0xf]
    %v106 = vld [vmem:[#allocation6 + $0xb0] sm:$0xf]
    %v107 = vld [vmem:[#allocation6 + $0xb4] sm:$0xf]
    %v108 = vld [vmem:[#allocation6 + $0xb8] sm:$0xf]
    %v109 = vld [vmem:[#allocation6 + $0xbc] sm:$0xf]
    %v110 = vld [vmem:[#allocation6 + $0xc0] sm:$0xf]
    %v111 = vld [vmem:[#allocation6 + $0xc4] sm:$0xf]
    %v112 = vld [vmem:[#allocation6 + $0xc8] sm:$0xf]
    %v113 = vld [vmem:[#allocation6 + $0xcc] sm:$0xf]
    %v114 = vld [vmem:[#allocation6 + $0xd0] sm:$0xf]
    %v115 = vld [vmem:[#allocation6 + $0xd4] sm:$0xf]
    %v116 = vld [vmem:[#allocation6 + $0xd8] sm:$0xf]
    %v117 = vld [vmem:[#allocation6 + $0xdc] sm:$0xf]
    %v118 = vld [vmem:[#allocation6 + $0xe0] sm:$0xf]
    %v119 = vld [vmem:[#allocation6 + $0xe4] sm:$0xf]
    %v120 = vld [vmem:[#allocation6 + $0xe8] sm:$0xf]
    %v121 = vld [vmem:[#allocation6 + $0xec] sm:$0xf]
    %v122 = vld [vmem:[#allocation6 + $0xf0] sm:$0xf]
    %v123 = vld [vmem:[#allocation6 + $0xf4] sm:$0xf]
    %v124 = vld [vmem:[#allocation6 + $0xf8] sm:$0xf]
    %v125 = vld [vmem:[#allocation6 + $0xfc] sm:$0xf]
    %v126 = vld [vmem:[#allocation6 + $0x100] sm:$0xf]
    %v127 = vld [vmem:[#allocation6 + $0x104] sm:$0xf]
    %v128 = vld [vmem:[#allocation6 + $0x108] sm:$0xf]
    %v129 = vld [vmem:[#allocation6 + $0x10c] sm:$0xf]
    %v130 = vld [vmem:[#allocation6 + $0x110] sm:$0xf]
    %v131 = vld [vmem:[#allocation6 + $0x114] sm:$0xf]
    %v132 = vld [vmem:[#allocation6 + $0x118] sm:$0xf]
    %v133 = vld [vmem:[#allocation6 + $0x11c] sm:$0xf]
    %v134 = vld [vmem:[#allocation6 + $0x120] sm:$0xf]
    %v135 = vld [vmem:[#allocation6 + $0x124] sm:$0xf]
    %v136 = vld [vmem:[#allocation6 + $0x128] sm:$0xf]
    %v137 = vld [vmem:[#allocation6 + $0x12c] sm:$0xf]
    %v138 = vld [vmem:[#allocation6 + $0x130] sm:$0xf]
    %v139 = vld [vmem:[#allocation6 + $0x134] sm:$0xf]
    %v140 = vld [vmem:[#allocation6 + $0x138] sm:$0xf]
    %v141 = vld [vmem:[#allocation6 + $0x13c] sm:$0xf]
    %v142 = vld [vmem:[#allocation6 + $0x140] sm:$0xf]
    %v143 = vld [vmem:[#allocation6 + $0x144] sm:$0xf]
    %v144 = vld [vmem:[#allocation6 + $0x148] sm:$0xf]
    %v145 = vld [vmem:[#allocation6 + $0x14c] sm:$0xf]
    %v146 = vld [vmem:[#allocation6 + $0x150] sm:$0xf]
    %v147 = vld [vmem:[#allocation6 + $0x154] sm:$0xf]
    %v148 = vld [vmem:[#allocation6 + $0x158] sm:$0xf]
    %v149 = vld [vmem:[#allocation6 + $0x15c] sm:$0xf]
    %v150 = vld [vmem:[#allocation6 + $0x160] sm:$0xf]
    %v151 = vld [vmem:[#allocation6 + $0x164] sm:$0xf]
    %v152 = vld [vmem:[#allocation6 + $0x168] sm:$0xf]
    %v153 = vld [vmem:[#allocation6 + $0x16c] sm:$0xf]
    %v154 = vld [vmem:[#allocation6 + $0x170] sm:$0xf]
    %v155 = vld [vmem:[#allocation6 + $0x174] sm:$0xf]
    %v156 = vld [vmem:[#allocation6 + $0x178] sm:$0xf]
    %v157 = vld [vmem:[#allocation6 + $0x17c] sm:$0xf]
    %v158 = vld [vmem:[#allocation6 + $0x180] sm:$0xf]
    %v159 = vld [vmem:[#allocation6 + $0x184] sm:$0xf]
    %v160 = vld [vmem:[#allocation6 + $0x188] sm:$0xf]
    %v161 = vld [vmem:[#allocation6 + $0x18c] sm:$0xf]
    %v162 = vld [vmem:[#allocation6 + $0x190] sm:$0xf]
    %v163 = vld [vmem:[#allocation6 + $0x194] sm:$0xf]
    %v164 = vld [vmem:[#allocation6 + $0x198] sm:$0xf]
    %v165 = vld [vmem:[#allocation6 + $0x19c] sm:$0xf]
    %v166 = vld [vmem:[#allocation6 + $0x1a0] sm:$0xf]
    %v167 = vld [vmem:[#allocation6 + $0x1a4] sm:$0xf]
    %v168 = vld [vmem:[#allocation6 + $0x1a8] sm:$0xf]
    %v169 = vld [vmem:[#allocation6 + $0x1ac] sm:$0xf]
    %v170 = vld [vmem:[#allocation6 + $0x1b0] sm:$0xf]
    %v171 = vld [vmem:[#allocation6 + $0x1b4] sm:$0xf]
    %v172 = vld [vmem:[#allocation6 + $0x1b8] sm:$0xf]
    %v173 = vld [vmem:[#allocation6 + $0x1bc] sm:$0xf]
    %v174 = vld [vmem:[#allocation6 + $0x1c0] sm:$0xf]
    %v175 = vld [vmem:[#allocation6 + $0x1c4] sm:$0xf]
    %v176 = vld [vmem:[#allocation6 + $0x1c8] sm:$0xf]
    %v177 = vld [vmem:[#allocation6 + $0x1cc] sm:$0xf]
    %v178 = vld [vmem:[#allocation6 + $0x1d0] sm:$0xf]
    %v179 = vld [vmem:[#allocation6 + $0x1d4] sm:$0xf]
    %v180 = vld [vmem:[#allocation6 + $0x1d8] sm:$0xf]
    %v181 = vld [vmem:[#allocation6 + $0x1dc] sm:$0xf]
    %v182 = vld [vmem:[#allocation6 + $0x1e0] sm:$0xf]
    %v183 = vld [vmem:[#allocation6 + $0x1e4] sm:$0xf]
    %v184 = vld [vmem:[#allocation6 + $0x1e8] sm:$0xf]
    %v185 = vld [vmem:[#allocation6 + $0x1ec] sm:$0xf]
    %v186 = vld [vmem:[#allocation6 + $0x1f0] sm:$0xf]
    %v187 = vld [vmem:[#allocation6 + $0x1f4] sm:$0xf]
    %v188 = vld [vmem:[#allocation6 + $0x1f8] sm:$0xf]
    %v189 = vld [vmem:[#allocation6 + $0x1fc] sm:$0xf]
    %v190 = vld [vmem:[#allocation6 + $0x200] sm:$0xf]
    %v191 = vld [vmem:[#allocation6 + $0x204] sm:$0xf]
    %v192 = vld [vmem:[#allocation6 + $0x208] sm:$0xf]
    %v193 = vld [vmem:[#allocation6 + $0x20c] sm:$0xf]
    %v194 = vld [vmem:[#allocation6 + $0x210] sm:$0xf]
    %v195 = vld [vmem:[#allocation6 + $0x214] sm:$0xf]
    %v196 = vld [vmem:[#allocation6 + $0x218] sm:$0xf]
    %v197 = vld [vmem:[#allocation6 + $0x21c] sm:$0xf]
    %v198 = vld [vmem:[#allocation6 + $0x220] sm:$0xf]
    %v199 = vld [vmem:[#allocation6 + $0x224] sm:$0xf]
    %v200 = vld [vmem:[#allocation6 + $0x228] sm:$0xf]
    %v201 = vld [vmem:[#allocation6 + $0x22c] sm:$0xf]
    %v202 = vld [vmem:[#allocation6 + $0x230] sm:$0xf]
    %v203 = vld [vmem:[#allocation6 + $0x234] sm:$0xf]
    %v204 = vld [vmem:[#allocation6 + $0x238] sm:$0xf]
    %v205 = vld [vmem:[#allocation6 + $0x23c] sm:$0xf]
    %v206 = vld [vmem:[#allocation6 + $0x240] sm:$0xf]
    %v207 = vld [vmem:[#allocation6 + $0x244] sm:$0xf]
    %v208 = vld [vmem:[#allocation6 + $0x248] sm:$0xf]
    %v209 = vld [vmem:[#allocation6 + $0x24c] sm:$0xf]
    %v210 = vld [vmem:[#allocation6 + $0x250] sm:$0xf]
    %v211 = vld [vmem:[#allocation6 + $0x254] sm:$0xf]
    %v212 = vld [vmem:[#allocation6 + $0x258] sm:$0xf]
    %v213 = vld [vmem:[#allocation6 + $0x25c] sm:$0xf]
    %v214 = vld [vmem:[#allocation6 + $0x260] sm:$0xf]
    %v215 = vld [vmem:[#allocation6 + $0x264] sm:$0xf]
    %v216 = vld [vmem:[#allocation6 + $0x268] sm:$0xf]
    %v217 = vld [vmem:[#allocation6 + $0x26c] sm:$0xf]
    %v218 = vld [vmem:[#allocation6 + $0x270] sm:$0xf]
    %v219 = vld [vmem:[#allocation6 + $0x274] sm:$0xf]
    %v220 = vld [vmem:[#allocation6 + $0x278] sm:$0xf]
    %v221 = vld [vmem:[#allocation6 + $0x27c] sm:$0xf]
    %v222 = vld [vmem:[#allocation6 + $0x280] sm:$0xf]
    %v223 = vld [vmem:[#allocation6 + $0x284] sm:$0xf]
    %v224 = vld [vmem:[#allocation6 + $0x288] sm:$0xf]
    %v225 = vld [vmem:[#allocation6 + $0x28c] sm:$0xf]
    %v226 = vld [vmem:[#allocation6 + $0x290] sm:$0xf]
    %v227 = vld [vmem:[#allocation6 + $0x294] sm:$0xf]
    %v228 = vld [vmem:[#allocation6 + $0x298] sm:$0xf]
    %v229 = vld [vmem:[#allocation6 + $0x29c] sm:$0xf]
    %v230 = vld [vmem:[#allocation6 + $0x2a0] sm:$0xf]
    %v231 = vld [vmem:[#allocation6 + $0x2a4] sm:$0xf]
    %v232 = vld [vmem:[#allocation6 + $0x2a8] sm:$0xf]
    %v233 = vld [vmem:[#allocation6 + $0x2ac] sm:$0xf]
    %v234 = vld [vmem:[#allocation6 + $0x2b0] sm:$0xf]
    %v235 = vld [vmem:[#allocation6 + $0x2b4] sm:$0xf]
    %v236 = vld [vmem:[#allocation6 + $0x2b8] sm:$0xf]
    %v237 = vld [vmem:[#allocation6 + $0x2bc] sm:$0xf]
    %v238 = vld [vmem:[#allocation6 + $0x2c0] sm:$0xf]
    %v239 = vld [vmem:[#allocation6 + $0x2c4] sm:$0xf]
    %v240 = vld [vmem:[#allocation6 + $0x2c8] sm:$0xf]
    %v241 = vld [vmem:[#allocation6 + $0x2cc] sm:$0xf]
    %v242 = vld [vmem:[#allocation6 + $0x2d0] sm:$0xf]
    %v243 = vld [vmem:[#allocation6 + $0x2d4] sm:$0xf]
    %v244 = vld [vmem:[#allocation6 + $0x2d8] sm:$0xf]
    %v245 = vld [vmem:[#allocation6 + $0x2dc] sm:$0xf]
    %v246 = vld [vmem:[#allocation6 + $0x2e0] sm:$0xf]
    %v247 = vld [vmem:[#allocation6 + $0x2e4] sm:$0xf]
    %v248 = vld [vmem:[#allocation6 + $0x2e8] sm:$0xf]
    %v249 = vld [vmem:[#allocation6 + $0x2ec] sm:$0xf]
    %v250 = vld [vmem:[#allocation6 + $0x2f0] sm:$0xf]
    %v251 = vld [vmem:[#allocation6 + $0x2f4] sm:$0xf]
    %v252 = vld [vmem:[#allocation6 + $0x2f8] sm:$0xf]
    %v253 = vld [vmem:[#allocation6 + $0x2fc] sm:$0xf]
    %v254 = vld [vmem:[#allocation6 + $0x300] sm:$0xf]
    %v255 = vld [vmem:[#allocation6 + $0x304] sm:$0xf]
    %v256 = vld [vmem:[#allocation6 + $0x308] sm:$0xf]
    %v257 = vld [vmem:[#allocation6 + $0x30c] sm:$0xf]
    %v258 = vld [vmem:[#allocation6 + $0x310] sm:$0xf]
    %v259 = vld [vmem:[#allocation6 + $0x314] sm:$0xf]
    %v260 = vld [vmem:[#allocation6 + $0x318] sm:$0xf]
    %v261 = vld [vmem:[#allocation6 + $0x31c] sm:$0xf]
    %v262 = vld [vmem:[#allocation6 + $0x320] sm:$0xf]
    %v263 = vld [vmem:[#allocation6 + $0x324] sm:$0xf]
    %v264 = vld [vmem:[#allocation6 + $0x328] sm:$0xf]
    %v265 = vld [vmem:[#allocation6 + $0x32c] sm:$0xf]
    %v266 = vld [vmem:[#allocation6 + $0x330] sm:$0xf]
    %v267 = vld [vmem:[#allocation6 + $0x334] sm:$0xf]
    %v268 = vld [vmem:[#allocation6 + $0x338] sm:$0xf]
    %v269 = vld [vmem:[#allocation6 + $0x33c] sm:$0xf]
    %v270 = vld [vmem:[#allocation6 + $0x340] sm:$0xf]
    %v271 = vld [vmem:[#allocation6 + $0x344] sm:$0xf]
    %v272 = vld [vmem:[#allocation6 + $0x348] sm:$0xf]
    %v273 = vld [vmem:[#allocation6 + $0x34c] sm:$0xf]
    %v274 = vld [vmem:[#allocation6 + $0x350] sm:$0xf]
    %v275 = vld [vmem:[#allocation6 + $0x354] sm:$0xf]
    %v276 = vld [vmem:[#allocation6 + $0x358] sm:$0xf]
    %v277 = vld [vmem:[#allocation6 + $0x35c] sm:$0xf]
    %v278 = vld [vmem:[#allocation6 + $0x360] sm:$0xf]
    %v279 = vld [vmem:[#allocation6 + $0x364] sm:$0xf]
    %v280 = vld [vmem:[#allocation6 + $0x368] sm:$0xf]
    %v281 = vld [vmem:[#allocation6 + $0x36c] sm:$0xf]
    %v282 = vld [vmem:[#allocation6 + $0x370] sm:$0xf]
    %v283 = vld [vmem:[#allocation6 + $0x374] sm:$0xf]
    %v284 = vld [vmem:[#allocation6 + $0x378] sm:$0xf]
    %v285 = vld [vmem:[#allocation6 + $0x37c] sm:$0xf]
    %v286 = vld [vmem:[#allocation6 + $0x380] sm:$0xf]
    %v287 = vld [vmem:[#allocation6 + $0x384] sm:$0xf]
    %v288 = vld [vmem:[#allocation6 + $0x388] sm:$0xf]
    %v289 = vld [vmem:[#allocation6 + $0x38c] sm:$0xf]
    %v290 = vld [vmem:[#allocation6 + $0x390] sm:$0xf]
    %v291 = vld [vmem:[#allocation6 + $0x394] sm:$0xf]
    %v292 = vld [vmem:[#allocation6 + $0x398] sm:$0xf]
    %v293 = vld [vmem:[#allocation6 + $0x39c] sm:$0xf]
    %v294 = vld [vmem:[#allocation6 + $0x3a0] sm:$0xf]
    %v295 = vld [vmem:[#allocation6 + $0x3a4] sm:$0xf]
    %v296 = vld [vmem:[#allocation6 + $0x3a8] sm:$0xf]
    %v297 = vld [vmem:[#allocation6 + $0x3ac] sm:$0xf]
    %v298 = vld [vmem:[#allocation6 + $0x3b0] sm:$0xf]
    %v299 = vld [vmem:[#allocation6 + $0x3b4] sm:$0xf]
    %v300 = vld [vmem:[#allocation6 + $0x3b8] sm:$0xf]
    %v301 = vld [vmem:[#allocation6 + $0x3bc] sm:$0xf]
    %v302 = vld [vmem:[#allocation6 + $0x3c0] sm:$0xf]
    %v303 = vld [vmem:[#allocation6 + $0x3c4] sm:$0xf]
    %v304 = vld [vmem:[#allocation6 + $0x3c8] sm:$0xf]
    %v305 = vld [vmem:[#allocation6 + $0x3cc] sm:$0xf]
    %v306 = vld [vmem:[#allocation6 + $0x3d0] sm:$0xf]
    %v307 = vld [vmem:[#allocation6 + $0x3d4] sm:$0xf]
    %v308 = vld [vmem:[#allocation6 + $0x3d8] sm:$0xf]
    %v309 = vld [vmem:[#allocation6 + $0x3dc] sm:$0xf]
    %v310 = vld [vmem:[#allocation6 + $0x3e0] sm:$0xf]
    %v311 = vld [vmem:[#allocation6 + $0x3e4] sm:$0xf]
    %v312 = vld [vmem:[#allocation6 + $0x3e8] sm:$0xf]
    %v313 = vld [vmem:[#allocation6 + $0x3ec] sm:$0xf]
    %v314 = vld [vmem:[#allocation6 + $0x3f0] sm:$0xf]
    %v315 = vld [vmem:[#allocation6 + $0x3f4] sm:$0xf]
    %v316 = vld [vmem:[#allocation6 + $0x3f8] sm:$0xf]
    %v317 = vld [vmem:[#allocation6 + $0x3fc] sm:$0xf]
    %v318 = vld [vmem:[#allocation6 + $0x400] sm:$0xf]
    %v319 = vld [vmem:[#allocation6 + $0x404] sm:$0xf]
    %v320 = vld [vmem:[#allocation6 + $0x408] sm:$0xf]
    %v321 = vld [vmem:[#allocation6 + $0x40c] sm:$0xf]
    %v322 = vld [vmem:[#allocation6 + $0x410] sm:$0xf]
    %v323 = vld [vmem:[#allocation6 + $0x414] sm:$0xf]
    %v324 = vld [vmem:[#allocation6 + $0x418] sm:$0xf]
    %v325 = vld [vmem:[#allocation6 + $0x41c] sm:$0xf]
    %v326 = vld [vmem:[#allocation6 + $0x420] sm:$0xf]
    %v327 = vld [vmem:[#allocation6 + $0x424] sm:$0xf]
    %v328 = vld [vmem:[#allocation6 + $0x428] sm:$0xf]
    %v329 = vld [vmem:[#allocation6 + $0x42c] sm:$0xf]
    %v330 = vld [vmem:[#allocation6 + $0x430] sm:$0xf]
    %v331 = vld [vmem:[#allocation6 + $0x434] sm:$0xf]
    %v332 = vld [vmem:[#allocation6 + $0x438] sm:$0xf]
    %v333 = vld [vmem:[#allocation6 + $0x43c] sm:$0xf]
    %v334 = vld [vmem:[#allocation6 + $0x440] sm:$0xf]
    %v335 = vld [vmem:[#allocation6 + $0x444] sm:$0xf]
    %v336 = vld [vmem:[#allocation6 + $0x448] sm:$0xf]
    %v337 = vld [vmem:[#allocation6 + $0x44c] sm:$0xf]
    %v338 = vld [vmem:[#allocation6 + $0x450] sm:$0xf]
    %v339 = vld [vmem:[#allocation6 + $0x454] sm:$0xf]
    %v340 = vld [vmem:[#allocation6 + $0x458] sm:$0xf]
    %v341 = vld [vmem:[#allocation6 + $0x45c] sm:$0xf]
    %v342 = vld [vmem:[#allocation6 + $0x460] sm:$0xf]
    %v343 = vld [vmem:[#allocation6 + $0x464] sm:$0xf]
    %v344 = vld [vmem:[#allocation6 + $0x468] sm:$0xf]
    %v345 = vld [vmem:[#allocation6 + $0x46c] sm:$0xf]
    %v346 = vld [vmem:[#allocation6 + $0x470] sm:$0xf]
    %v347 = vld [vmem:[#allocation6 + $0x474] sm:$0xf]
    %v348 = vld [vmem:[#allocation6 + $0x478] sm:$0xf]
    %v349 = vld [vmem:[#allocation6 + $0x47c] sm:$0xf]
    %v350 = vld [vmem:[#allocation6 + $0x480] sm:$0xf]
    %v351 = vld [vmem:[#allocation6 + $0x484] sm:$0xf]
    %v352 = vld [vmem:[#allocation6 + $0x488] sm:$0xf]
    %v353 = vld [vmem:[#allocation6 + $0x48c] sm:$0xf]
    %v354 = vld [vmem:[#allocation6 + $0x490] sm:$0xf]
    %v355 = vld [vmem:[#allocation6 + $0x494] sm:$0xf]
    %v356 = vld [vmem:[#allocation6 + $0x498] sm:$0xf]
    %v357 = vld [vmem:[#allocation6 + $0x49c] sm:$0xf]
    %v358 = vld [vmem:[#allocation6 + $0x4a0] sm:$0xf]
    %v359 = vld [vmem:[#allocation6 + $0x4a4] sm:$0xf]
    %v360 = vld [vmem:[#allocation6 + $0x4a8] sm:$0xf]
    %v361 = vld [vmem:[#allocation6 + $0x4ac] sm:$0xf]
    %v362 = vld [vmem:[#allocation6 + $0x4b0] sm:$0xf]
    %v363 = vld [vmem:[#allocation6 + $0x4b4] sm:$0xf]
    %v364 = vld [vmem:[#allocation6 + $0x4b8] sm:$0xf]
    %v365 = vld [vmem:[#allocation6 + $0x4bc] sm:$0xf]
    %v366 = vld [vmem:[#allocation6 + $0x4c0] sm:$0xf]
    %v367 = vld [vmem:[#allocation6 + $0x4c4] sm:$0xf]
    %v368 = vld [vmem:[#allocation6 + $0x4c8] sm:$0xf]
    %v369 = vld [vmem:[#allocation6 + $0x4cc] sm:$0xf]
    %v370 = vld [vmem:[#allocation6 + $0x4d0] sm:$0xf]
    %v371 = vld [vmem:[#allocation6 + $0x4d4] sm:$0xf]
    %v372 = vld [vmem:[#allocation6 + $0x4d8] sm:$0xf]
    %v373 = vld [vmem:[#allocation6 + $0x4dc] sm:$0xf]
    %v374 = vld [vmem:[#allocation6 + $0x4e0] sm:$0xf]
    %v375 = vld [vmem:[#allocation6 + $0x4e4] sm:$0xf]
    %v376 = vld [vmem:[#allocation6 + $0x4e8] sm:$0xf]
    %v377 = vld [vmem:[#allocation6 + $0x4ec] sm:$0xf]
    %v378 = vld [vmem:[#allocation6 + $0x4f0] sm:$0xf]
    %v379 = vld [vmem:[#allocation6 + $0x4f4] sm:$0xf]
    %v380 = vld [vmem:[#allocation6 + $0x4f8] sm:$0xf]
    %v381 = vld [vmem:[#allocation6 + $0x4fc] sm:$0xf]
    %v382 = vld [vmem:[#allocation6 + $0x500] sm:$0xf]
    %v383 = vld [vmem:[#allocation6 + $0x504] sm:$0xf]
    %v384 = vld [vmem:[#allocation6 + $0x508] sm:$0xf]
    %v385 = vld [vmem:[#allocation6 + $0x50c] sm:$0xf]
    %v386 = vld [vmem:[#allocation6 + $0x510] sm:$0xf]
    %v387 = vld [vmem:[#allocation6 + $0x514] sm:$0xf]
    %v388 = vld [vmem:[#allocation6 + $0x518] sm:$0xf]
    %v389 = vld [vmem:[#allocation6 + $0x51c] sm:$0xf]
    %v390 = vld [vmem:[#allocation6 + $0x520] sm:$0xf]
    %v391 = vld [vmem:[#allocation6 + $0x524] sm:$0xf]
    %v392 = vld [vmem:[#allocation6 + $0x528] sm:$0xf]
    %v393 = vld [vmem:[#allocation6 + $0x52c] sm:$0xf]
    %v394 = vld [vmem:[#allocation6 + $0x530] sm:$0xf]
    %v395 = vld [vmem:[#allocation6 + $0x534] sm:$0xf]
    %v396 = vld [vmem:[#allocation6 + $0x538] sm:$0xf]
    %v397 = vld [vmem:[#allocation6 + $0x53c] sm:$0xf]
    %v398 = vld [vmem:[#allocation6 + $0x540] sm:$0xf]
    %v399 = vld [vmem:[#allocation6 + $0x544] sm:$0xf]
    %v400 = vld [vmem:[#allocation6 + $0x548] sm:$0xf]
    %v401 = vld [vmem:[#allocation6 + $0x54c] sm:$0xf]
    %v402 = vld [vmem:[#allocation6 + $0x550] sm:$0xf]
    %v403 = vld [vmem:[#allocation6 + $0x554] sm:$0xf]
    %v404 = vld [vmem:[#allocation6 + $0x558] sm:$0xf]
    %v405 = vld [vmem:[#allocation6 + $0x55c] sm:$0xf]
    %v406 = vld [vmem:[#allocation6 + $0x560] sm:$0xf]
    %v407 = vld [vmem:[#allocation6 + $0x564] sm:$0xf]
    %v408 = vld [vmem:[#allocation6 + $0x568] sm:$0xf]
    %v409 = vld [vmem:[#allocation6 + $0x56c] sm:$0xf]
    %v410 = vld [vmem:[#allocation6 + $0x570] sm:$0xf]
    %v411 = vld [vmem:[#allocation6 + $0x574] sm:$0xf]
    %v412 = vld [vmem:[#allocation6 + $0x578] sm:$0xf]
    %v413 = vld [vmem:[#allocation6 + $0x57c] sm:$0xf]
    %v414 = vld [vmem:[#allocation6 + $0x580] sm:$0xf]
    %v415 = vld [vmem:[#allocation6 + $0x584] sm:$0xf]
    %v416 = vld [vmem:[#allocation6 + $0x588] sm:$0xf]
    %v417 = vld [vmem:[#allocation6 + $0x58c] sm:$0xf]
    %v418 = vld [vmem:[#allocation6 + $0x590] sm:$0xf]
    %v419 = vld [vmem:[#allocation6 + $0x594] sm:$0xf]
    %v420 = vld [vmem:[#allocation6 + $0x598] sm:$0xf]
    %v421 = vld [vmem:[#allocation6 + $0x59c] sm:$0xf]
    %v422 = vld [vmem:[#allocation6 + $0x5a0] sm:$0xf]
    %v423 = vld [vmem:[#allocation6 + $0x5a4] sm:$0xf]
    %v424 = vld [vmem:[#allocation6 + $0x5a8] sm:$0xf]
    %v425 = vld [vmem:[#allocation6 + $0x5ac] sm:$0xf]
    %v426 = vld [vmem:[#allocation6 + $0x5b0] sm:$0xf]
    %v427 = vld [vmem:[#allocation6 + $0x5b4] sm:$0xf]
    %v428 = vld [vmem:[#allocation6 + $0x5b8] sm:$0xf]
    %v429 = vld [vmem:[#allocation6 + $0x5bc] sm:$0xf]
    %v430 = vld [vmem:[#allocation6 + $0x5c0] sm:$0xf]
    %v431 = vld [vmem:[#allocation6 + $0x5c4] sm:$0xf]
    %v432 = vld [vmem:[#allocation6 + $0x5c8] sm:$0xf]
    %v433 = vld [vmem:[#allocation6 + $0x5cc] sm:$0xf]
    %v434 = vld [vmem:[#allocation6 + $0x5d0] sm:$0xf]
    %v435 = vld [vmem:[#allocation6 + $0x5d4] sm:$0xf]
    %v436 = vld [vmem:[#allocation6 + $0x5d8] sm:$0xf]
    %v437 = vld [vmem:[#allocation6 + $0x5dc] sm:$0xf]
    %v438 = vld [vmem:[#allocation6 + $0x5e0] sm:$0xf]
    %v439 = vld [vmem:[#allocation6 + $0x5e4] sm:$0xf]
    %v440 = vld [vmem:[#allocation6 + $0x5e8] sm:$0xf]
    %v441 = vld [vmem:[#allocation6 + $0x5ec] sm:$0xf]
    %v442 = vld [vmem:[#allocation6 + $0x5f0] sm:$0xf]
    %v443 = vld [vmem:[#allocation6 + $0x5f4] sm:$0xf]
    %v444 = vld [vmem:[#allocation6 + $0x5f8] sm:$0xf]
    %v445 = vld [vmem:[#allocation6 + $0x5fc] sm:$0xf]
    %v446 = vld [vmem:[#allocation6 + $0x600] sm:$0xf]
    %v447 = vld [vmem:[#allocation6 + $0x604] sm:$0xf]
    %v448 = vld [vmem:[#allocation6 + $0x608] sm:$0xf]
    %v449 = vld [vmem:[#allocation6 + $0x60c] sm:$0xf]
    %v450 = vld [vmem:[#allocation6 + $0x610] sm:$0xf]
    %v451 = vld [vmem:[#allocation6 + $0x614] sm:$0xf]
    %v452 = vld [vmem:[#allocation6 + $0x618] sm:$0xf]
    %v453 = vld [vmem:[#allocation6 + $0x61c] sm:$0xf]
    %v454 = vld [vmem:[#allocation6 + $0x620] sm:$0xf]
    %v455 = vld [vmem:[#allocation6 + $0x624] sm:$0xf]
    %v456 = vld [vmem:[#allocation6 + $0x628] sm:$0xf]
    %v457 = vld [vmem:[#allocation6 + $0x62c] sm:$0xf]
    %v458 = vld [vmem:[#allocation6 + $0x630] sm:$0xf]
    %v459 = vld [vmem:[#allocation6 + $0x634] sm:$0xf]
    %v460 = vld [vmem:[#allocation6 + $0x638] sm:$0xf]
    %v461 = vld [vmem:[#allocation6 + $0x63c] sm:$0xf]
    %v462 = vld [vmem:[#allocation6 + $0x640] sm:$0xf]
    %v463 = vld [vmem:[#allocation6 + $0x644] sm:$0xf]
    %v464 = vld [vmem:[#allocation6 + $0x648] sm:$0xf]
    %v465 = vld [vmem:[#allocation6 + $0x64c] sm:$0xf]
    %v466 = vld [vmem:[#allocation6 + $0x650] sm:$0xf]
    %v467 = vld [vmem:[#allocation6 + $0x654] sm:$0xf]
    %v468 = vld [vmem:[#allocation6 + $0x658] sm:$0xf]
    %v469 = vld [vmem:[#allocation6 + $0x65c] sm:$0xf]
    %v470 = vld [vmem:[#allocation6 + $0x660] sm:$0xf]
    %v471 = vld [vmem:[#allocation6 + $0x664] sm:$0xf]
    %v472 = vld [vmem:[#allocation6 + $0x668] sm:$0xf]
    %v473 = vld [vmem:[#allocation6 + $0x66c] sm:$0xf]
    %v474 = vld [vmem:[#allocation6 + $0x670] sm:$0xf]
    %v475 = vld [vmem:[#allocation6 + $0x674] sm:$0xf]
    %v476 = vld [vmem:[#allocation6 + $0x678] sm:$0xf]
    %v477 = vld [vmem:[#allocation6 + $0x67c] sm:$0xf]
    %v478 = vld [vmem:[#allocation6 + $0x680] sm:$0xf]
    %v479 = vld [vmem:[#allocation6 + $0x684] sm:$0xf]
    %v480 = vld [vmem:[#allocation6 + $0x688] sm:$0xf]
    %v481 = vld [vmem:[#allocation6 + $0x68c] sm:$0xf]
    %v482 = vld [vmem:[#allocation6 + $0x690] sm:$0xf]
    %v483 = vld [vmem:[#allocation6 + $0x694] sm:$0xf]
    %v484 = vld [vmem:[#allocation6 + $0x698] sm:$0xf]
    %v485 = vld [vmem:[#allocation6 + $0x69c] sm:$0xf]
    %v486 = vld [vmem:[#allocation6 + $0x6a0] sm:$0xf]
    %v487 = vld [vmem:[#allocation6 + $0x6a4] sm:$0xf]
    %v488 = vld [vmem:[#allocation6 + $0x6a8] sm:$0xf]
    %v489 = vld [vmem:[#allocation6 + $0x6ac] sm:$0xf]
    %v490 = vld [vmem:[#allocation6 + $0x6b0] sm:$0xf]
    %v491 = vld [vmem:[#allocation6 + $0x6b4] sm:$0xf]
    %v492 = vld [vmem:[#allocation6 + $0x6b8] sm:$0xf]
    %v493 = vld [vmem:[#allocation6 + $0x6bc] sm:$0xf]
    %v494 = vld [vmem:[#allocation6 + $0x6c0] sm:$0xf]
    %v495 = vld [vmem:[#allocation6 + $0x6c4] sm:$0xf]
    %v496 = vld [vmem:[#allocation6 + $0x6c8] sm:$0xf]
    %v497 = vld [vmem:[#allocation6 + $0x6cc] sm:$0xf]
    %v498 = vld [vmem:[#allocation6 + $0x6d0] sm:$0xf]
    %v499 = vld [vmem:[#allocation6 + $0x6d4] sm:$0xf]
    %v500 = vld [vmem:[#allocation6 + $0x6d8] sm:$0xf]
    %v501 = vld [vmem:[#allocation6 + $0x6dc] sm:$0xf]
    %v502 = vld [vmem:[#allocation6 + $0x6e0] sm:$0xf]
    %v503 = vld [vmem:[#allocation6 + $0x6e4] sm:$0xf]
    %v504 = vld [vmem:[#allocation6 + $0x6e8] sm:$0xf]
    %v505 = vld [vmem:[#allocation6 + $0x6ec] sm:$0xf]
    %v506 = vld [vmem:[#allocation6 + $0x6f0] sm:$0xf]
    %v507 = vld [vmem:[#allocation6 + $0x6f4] sm:$0xf]
    %v508 = vld [vmem:[#allocation6 + $0x6f8] sm:$0xf]
    %v509 = vld [vmem:[#allocation6 + $0x6fc] sm:$0xf]
    %v510 = vld [vmem:[#allocation6 + $0x700] sm:$0xf]
    %v511 = vld [vmem:[#allocation6 + $0x704] sm:$0xf]
    %v512 = vld [vmem:[#allocation6 + $0x708] sm:$0xf]
    %v513 = vld [vmem:[#allocation6 + $0x70c] sm:$0xf]
    %v514 = vld [vmem:[#allocation6 + $0x710] sm:$0xf]
    %v515 = vld [vmem:[#allocation6 + $0x714] sm:$0xf]
    %v516 = vld [vmem:[#allocation6 + $0x718] sm:$0xf]
    %v517 = vld [vmem:[#allocation6 + $0x71c] sm:$0xf]
    %v518 = vld [vmem:[#allocation6 + $0x720] sm:$0xf]
    %v519 = vld [vmem:[#allocation6 + $0x724] sm:$0xf]
    %v520 = vld [vmem:[#allocation6 + $0x728] sm:$0xf]
    %v521 = vld [vmem:[#allocation6 + $0x72c] sm:$0xf]
    %v522 = vld [vmem:[#allocation6 + $0x730] sm:$0xf]
    %v523 = vld [vmem:[#allocation6 + $0x734] sm:$0xf]
    %v524 = vld [vmem:[#allocation6 + $0x738] sm:$0xf]
    %v525 = vld [vmem:[#allocation6 + $0x73c] sm:$0xf]
    %v526 = vld [vmem:[#allocation6 + $0x740] sm:$0xf]
    %v527 = vld [vmem:[#allocation6 + $0x744] sm:$0xf]
    %v528 = vld [vmem:[#allocation6 + $0x748] sm:$0xf]
    %v529 = vld [vmem:[#allocation6 + $0x74c] sm:$0xf]
    %v530 = vld [vmem:[#allocation6 + $0x750] sm:$0xf]
    %v531 = vld [vmem:[#allocation6 + $0x754] sm:$0xf]
    %v532 = vld [vmem:[#allocation6 + $0x758] sm:$0xf]
    %v533 = vld [vmem:[#allocation6 + $0x75c] sm:$0xf]
    %v534 = vld [vmem:[#allocation6 + $0x760] sm:$0xf]
    %v535 = vld [vmem:[#allocation6 + $0x764] sm:$0xf]
    %v536 = vld [vmem:[#allocation6 + $0x768] sm:$0xf]
    %v537 = vld [vmem:[#allocation6 + $0x76c] sm:$0xf]
    %v538 = vld [vmem:[#allocation6 + $0x770] sm:$0xf]
    %v539 = vld [vmem:[#allocation6 + $0x774] sm:$0xf]
    %v540 = vld [vmem:[#allocation6 + $0x778] sm:$0xf]
    %v541 = vld [vmem:[#allocation6 + $0x77c] sm:$0xf]
    %v542 = vld [vmem:[#allocation6 + $0x780] sm:$0xf]
    %v543 = vld [vmem:[#allocation6 + $0x784] sm:$0xf]
    %v544 = vld [vmem:[#allocation6 + $0x788] sm:$0xf]
    %v545 = vld [vmem:[#allocation6 + $0x78c] sm:$0xf]
    %v546 = vld [vmem:[#allocation6 + $0x790] sm:$0xf]
    %v547 = vld [vmem:[#allocation6 + $0x794] sm:$0xf]
    %v548 = vld [vmem:[#allocation6 + $0x798] sm:$0xf]
    %v549 = vld [vmem:[#allocation6 + $0x79c] sm:$0xf]
    %v550 = vld [vmem:[#allocation6 + $0x7a0] sm:$0xf]
    %v551 = vld [vmem:[#allocation6 + $0x7a4] sm:$0xf]
    %v552 = vld [vmem:[#allocation6 + $0x7a8] sm:$0xf]
    %v553 = vld [vmem:[#allocation6 + $0x7ac] sm:$0xf]
    %v554 = vld [vmem:[#allocation6 + $0x7b0] sm:$0xf]
    %v555 = vld [vmem:[#allocation6 + $0x7b4] sm:$0xf]
    %v556 = vld [vmem:[#allocation6 + $0x7b8] sm:$0xf]
    %v557 = vld [vmem:[#allocation6 + $0x7bc] sm:$0xf]
    %v558 = vld [vmem:[#allocation6 + $0x7c0] sm:$0xf]
    %v559 = vld [vmem:[#allocation6 + $0x7c4] sm:$0xf]
    %v560 = vld [vmem:[#allocation6 + $0x7c8] sm:$0xf]
    %v561 = vld [vmem:[#allocation6 + $0x7cc] sm:$0xf]
    %v562 = vld [vmem:[#allocation6 + $0x7d0] sm:$0xf]
    %v563 = vld [vmem:[#allocation6 + $0x7d4] sm:$0xf]
    %v564 = vld [vmem:[#allocation6 + $0x7d8] sm:$0xf]
    %v565 = vld [vmem:[#allocation6 + $0x7dc] sm:$0xf]
    %v566 = vld [vmem:[#allocation6 + $0x7e0] sm:$0xf]
    %v567 = vld [vmem:[#allocation6 + $0x7e4] sm:$0xf]
    %v568 = vld [vmem:[#allocation6 + $0x7e8] sm:$0xf]
    %v569 = vld [vmem:[#allocation6 + $0x7ec] sm:$0xf]
    %v570 = vld [vmem:[#allocation6 + $0x7f0] sm:$0xf]
    %v571 = vld [vmem:[#allocation6 + $0x7f4] sm:$0xf]
    %v572 = vld [vmem:[#allocation6 + $0x7f8] sm:$0xf]
    %v573 = vld [vmem:[#allocation6 + $0x7fc] sm:$0xf]
    %v574 = vld [vmem:[%s2] sm:$0x1]
    %v576 = vlaneseq
    %v577 = vshrl.u32 %v576, 7
    %v578 = vsub.s32 0, %v577
    %v579 = vrot.slane %v574, %v578
    %v597 = vunpack.c.l.b16 %v46
    %v598 = vunpack.c.h.b16 %v46
    %v599 = vunpack.c.l.b16 %v47
    %v600 = vunpack.c.h.b16 %v47
    %v601 = vunpack.c.l.b16 %v48
    %v602 = vunpack.c.h.b16 %v48
    %v603 = vunpack.c.l.b16 %v49
    %v604 = vunpack.c.h.b16 %v49
    %v605 = vunpack.c.l.b16 %v50
    %v606 = vunpack.c.h.b16 %v50
    %v607 = vunpack.c.l.b16 %v51
    %v608 = vunpack.c.h.b16 %v51
    %v609 = vunpack.c.l.b16 %v52
    %v610 = vunpack.c.h.b16 %v52
    %v611 = vunpack.c.l.b16 %v53
    %v612 = vunpack.c.h.b16 %v53
    %v613 = vunpack.c.l.b16 %v54
    %v614 = vunpack.c.h.b16 %v54
    %v615 = vunpack.c.l.b16 %v55
    %v616 = vunpack.c.h.b16 %v55
    %v617 = vunpack.c.l.b16 %v56
    %v618 = vunpack.c.h.b16 %v56
    %v619 = vunpack.c.l.b16 %v57
    %v620 = vunpack.c.h.b16 %v57
    %v621 = vunpack.c.l.b16 %v58
    %v622 = vunpack.c.h.b16 %v58
    %v623 = vunpack.c.l.b16 %v59
    %v624 = vunpack.c.h.b16 %v59
    %v625 = vunpack.c.l.b16 %v60
    %v626 = vunpack.c.h.b16 %v60
    %v627 = vunpack.c.l.b16 %v61
    %v628 = vunpack.c.h.b16 %v61
    %v629 = vpack.c.b16 %v597, %v597
    %v630 = vpack.c.b16 %v598, %v598
    %v631 = vpack.c.b16 %v599, %v599
    %v632 = vpack.c.b16 %v600, %v600
    %v633 = vpack.c.b16 %v601, %v601
    %v634 = vpack.c.b16 %v602, %v602
    %v635 = vpack.c.b16 %v603, %v603
    %v636 = vpack.c.b16 %v604, %v604
    %v637 = vpack.c.b16 %v605, %v605
    %v638 = vpack.c.b16 %v606, %v606
    %v639 = vpack.c.b16 %v607, %v607
    %v640 = vpack.c.b16 %v608, %v608
    %v641 = vpack.c.b16 %v609, %v609
    %v642 = vpack.c.b16 %v610, %v610
    %v643 = vpack.c.b16 %v611, %v611
    %v644 = vpack.c.b16 %v612, %v612
    %v645 = vpack.c.b16 %v613, %v613
    %v646 = vpack.c.b16 %v614, %v614
    %v647 = vpack.c.b16 %v615, %v615
    %v648 = vpack.c.b16 %v616, %v616
    %v649 = vpack.c.b16 %v617, %v617
    %v650 = vpack.c.b16 %v618, %v618
    %v651 = vpack.c.b16 %v619, %v619
    %v652 = vpack.c.b16 %v620, %v620
    %v653 = vpack.c.b16 %v621, %v621
    %v654 = vpack.c.b16 %v622, %v622
    %v655 = vpack.c.b16 %v623, %v623
    %v656 = vpack.c.b16 %v624, %v624
    %v657 = vpack.c.b16 %v625, %v625
    %v658 = vpack.c.b16 %v626, %v626
    %v659 = vpack.c.b16 %v627, %v627
    %v660 = vpack.c.b16 %v628, %v628
    %v1205 = vunpack.c.l.b16 %v62
    %v1206 = vunpack.c.l.b16 %v63
    %v1207 = vunpack.c.l.b16 %v64
    %v1208 = vunpack.c.l.b16 %v65
    %v1209 = vunpack.c.l.b16 %v66
    %v1210 = vunpack.c.l.b16 %v67
    %v1211 = vunpack.c.l.b16 %v68
    %v1212 = vunpack.c.l.b16 %v69
    %v1213 = vunpack.c.l.b16 %v70
    %v1214 = vunpack.c.l.b16 %v71
    %v1215 = vunpack.c.l.b16 %v72
    %v1216 = vunpack.c.l.b16 %v73
    %v1217 = vunpack.c.l.b16 %v74
    %v1218 = vunpack.c.l.b16 %v75
    %v1219 = vunpack.c.l.b16 %v76
    %v1220 = vunpack.c.l.b16 %v77
    %v1221 = vunpack.c.l.b16 %v78
    %v1222 = vunpack.c.l.b16 %v79
    %v1223 = vunpack.c.l.b16 %v80
    %v1224 = vunpack.c.l.b16 %v81
    %v1225 = vunpack.c.l.b16 %v82
    %v1226 = vunpack.c.l.b16 %v83
    %v1227 = vunpack.c.l.b16 %v84
    %v1228 = vunpack.c.l.b16 %v85
    %v1229 = vunpack.c.l.b16 %v86
    %v1230 = vunpack.c.l.b16 %v87
    %v1231 = vunpack.c.l.b16 %v88
    %v1232 = vunpack.c.l.b16 %v89
    %v1233 = vunpack.c.l.b16 %v90
    %v1234 = vunpack.c.l.b16 %v91
    %v1235 = vunpack.c.l.b16 %v92
    %v1236 = vunpack.c.l.b16 %v93
    %v1237 = vunpack.c.l.b16 %v94
    %v1238 = vunpack.c.l.b16 %v95
    %v1239 = vunpack.c.l.b16 %v96
    %v1240 = vunpack.c.l.b16 %v97
    %v1241 = vunpack.c.l.b16 %v98
    %v1242 = vunpack.c.l.b16 %v99
    %v1243 = vunpack.c.l.b16 %v100
    %v1244 = vunpack.c.l.b16 %v101
    %v1245 = vunpack.c.l.b16 %v102
    %v1246 = vunpack.c.l.b16 %v103
    %v1247 = vunpack.c.l.b16 %v104
    %v1248 = vunpack.c.l.b16 %v105
    %v1249 = vunpack.c.l.b16 %v106
    %v1250 = vunpack.c.l.b16 %v107
    %v1251 = vunpack.c.l.b16 %v108
    %v1252 = vunpack.c.l.b16 %v109
    %v1253 = vunpack.c.l.b16 %v110
    %v1254 = vunpack.c.l.b16 %v111
    %v1255 = vunpack.c.l.b16 %v112
    %v1256 = vunpack.c.l.b16 %v113
    %v1257 = vunpack.c.l.b16 %v114
    %v1258 = vunpack.c.l.b16 %v115
    %v1259 = vunpack.c.l.b16 %v116
    %v1260 = vunpack.c.l.b16 %v117
    %v1261 = vunpack.c.l.b16 %v118
    %v1262 = vunpack.c.l.b16 %v119
    %v1263 = vunpack.c.l.b16 %v120
    %v1264 = vunpack.c.l.b16 %v121
    %v1265 = vunpack.c.l.b16 %v122
    %v1266 = vunpack.c.l.b16 %v123
    %v1267 = vunpack.c.l.b16 %v124
    %v1268 = vunpack.c.l.b16 %v125
    %v1269 = vunpack.c.l.b16 %v126
    %v1270 = vunpack.c.l.b16 %v127
    %v1271 = vunpack.c.l.b16 %v128
    %v1272 = vunpack.c.l.b16 %v129
    %v1273 = vunpack.c.l.b16 %v130
    %v1274 = vunpack.c.l.b16 %v131
    %v1275 = vunpack.c.l.b16 %v132
    %v1276 = vunpack.c.l.b16 %v133
    %v1277 = vunpack.c.l.b16 %v134
    %v1278 = vunpack.c.l.b16 %v135
    %v1279 = vunpack.c.l.b16 %v136
    %v1280 = vunpack.c.l.b16 %v137
    %v1281 = vunpack.c.l.b16 %v138
    %v1282 = vunpack.c.l.b16 %v139
    %v1283 = vunpack.c.l.b16 %v140
    %v1284 = vunpack.c.l.b16 %v141
    %v1285 = vunpack.c.l.b16 %v142
    %v1286 = vunpack.c.l.b16 %v143
    %v1287 = vunpack.c.l.b16 %v144
    %v1288 = vunpack.c.l.b16 %v145
    %v1289 = vunpack.c.l.b16 %v146
    %v1290 = vunpack.c.l.b16 %v147
    %v1291 = vunpack.c.l.b16 %v148
    %v1292 = vunpack.c.l.b16 %v149
    %v1293 = vunpack.c.l.b16 %v150
    %v1294 = vunpack.c.l.b16 %v151
    %v1295 = vunpack.c.l.b16 %v152
    %v1296 = vunpack.c.l.b16 %v153
    %v1297 = vunpack.c.l.b16 %v154
    %v1298 = vunpack.c.l.b16 %v155
    %v1299 = vunpack.c.l.b16 %v156
    %v1300 = vunpack.c.l.b16 %v157
    %v1301 = vunpack.c.l.b16 %v158
    %v1302 = vunpack.c.l.b16 %v159
    %v1303 = vunpack.c.l.b16 %v160
    %v1304 = vunpack.c.l.b16 %v161
    %v1305 = vunpack.c.l.b16 %v162
    %v1306 = vunpack.c.l.b16 %v163
    %v1307 = vunpack.c.l.b16 %v164
    %v1308 = vunpack.c.l.b16 %v165
    %v1309 = vunpack.c.l.b16 %v166
    %v1310 = vunpack.c.l.b16 %v167
    %v1311 = vunpack.c.l.b16 %v168
    %v1312 = vunpack.c.l.b16 %v169
    %v1313 = vunpack.c.l.b16 %v170
    %v1314 = vunpack.c.l.b16 %v171
    %v1315 = vunpack.c.l.b16 %v172
    %v1316 = vunpack.c.l.b16 %v173
    %v1317 = vunpack.c.l.b16 %v174
    %v1318 = vunpack.c.l.b16 %v175
    %v1319 = vunpack.c.l.b16 %v176
    %v1320 = vunpack.c.l.b16 %v177
    %v1321 = vunpack.c.l.b16 %v178
    %v1322 = vunpack.c.l.b16 %v179
    %v1323 = vunpack.c.l.b16 %v180
    %v1324 = vunpack.c.l.b16 %v181
    %v1325 = vunpack.c.l.b16 %v182
    %v1326 = vunpack.c.l.b16 %v183
    %v1327 = vunpack.c.l.b16 %v184
    %v1328 = vunpack.c.l.b16 %v185
    %v1329 = vunpack.c.l.b16 %v186
    %v1330 = vunpack.c.l.b16 %v187
    %v1331 = vunpack.c.l.b16 %v188
    %v1332 = vunpack.c.l.b16 %v189
    %v1333 = vunpack.c.l.b16 %v190
    %v1334 = vunpack.c.l.b16 %v191
    %v1335 = vunpack.c.l.b16 %v192
    %v1336 = vunpack.c.l.b16 %v193
    %v1337 = vunpack.c.l.b16 %v194
    %v1338 = vunpack.c.l.b16 %v195
    %v1339 = vunpack.c.l.b16 %v196
    %v1340 = vunpack.c.l.b16 %v197
    %v1341 = vunpack.c.l.b16 %v198
    %v1342 = vunpack.c.l.b16 %v199
    %v1343 = vunpack.c.l.b16 %v200
    %v1344 = vunpack.c.l.b16 %v201
    %v1345 = vunpack.c.l.b16 %v202
    %v1346 = vunpack.c.l.b16 %v203
    %v1347 = vunpack.c.l.b16 %v204
    %v1348 = vunpack.c.l.b16 %v205
    %v1349 = vunpack.c.l.b16 %v206
    %v1350 = vunpack.c.l.b16 %v207
    %v1351 = vunpack.c.l.b16 %v208
    %v1352 = vunpack.c.l.b16 %v209
    %v1353 = vunpack.c.l.b16 %v210
    %v1354 = vunpack.c.l.b16 %v211
    %v1355 = vunpack.c.l.b16 %v212
    %v1356 = vunpack.c.l.b16 %v213
    %v1357 = vunpack.c.l.b16 %v214
    %v1358 = vunpack.c.l.b16 %v215
    %v1359 = vunpack.c.l.b16 %v216
    %v1360 = vunpack.c.l.b16 %v217
    %v1361 = vunpack.c.l.b16 %v218
    %v1362 = vunpack.c.l.b16 %v219
    %v1363 = vunpack.c.l.b16 %v220
    %v1364 = vunpack.c.l.b16 %v221
    %v1365 = vunpack.c.l.b16 %v222
    %v1366 = vunpack.c.l.b16 %v223
    %v1367 = vunpack.c.l.b16 %v224
    %v1368 = vunpack.c.l.b16 %v225
    %v1369 = vunpack.c.l.b16 %v226
    %v1370 = vunpack.c.l.b16 %v227
    %v1371 = vunpack.c.l.b16 %v228
    %v1372 = vunpack.c.l.b16 %v229
    %v1373 = vunpack.c.l.b16 %v230
    %v1374 = vunpack.c.l.b16 %v231
    %v1375 = vunpack.c.l.b16 %v232
    %v1376 = vunpack.c.l.b16 %v233
    %v1377 = vunpack.c.l.b16 %v234
    %v1378 = vunpack.c.l.b16 %v235
    %v1379 = vunpack.c.l.b16 %v236
    %v1380 = vunpack.c.l.b16 %v237
    %v1381 = vunpack.c.l.b16 %v238
    %v1382 = vunpack.c.l.b16 %v239
    %v1383 = vunpack.c.l.b16 %v240
    %v1384 = vunpack.c.l.b16 %v241
    %v1385 = vunpack.c.l.b16 %v242
    %v1386 = vunpack.c.l.b16 %v243
    %v1387 = vunpack.c.l.b16 %v244
    %v1388 = vunpack.c.l.b16 %v245
    %v1389 = vunpack.c.l.b16 %v246
    %v1390 = vunpack.c.l.b16 %v247
    %v1391 = vunpack.c.l.b16 %v248
    %v1392 = vunpack.c.l.b16 %v249
    %v1393 = vunpack.c.l.b16 %v250
    %v1394 = vunpack.c.l.b16 %v251
    %v1395 = vunpack.c.l.b16 %v252
    %v1396 = vunpack.c.l.b16 %v253
    %v1397 = vunpack.c.l.b16 %v254
    %v1398 = vunpack.c.l.b16 %v255
    %v1399 = vunpack.c.l.b16 %v256
    %v1400 = vunpack.c.l.b16 %v257
    %v1401 = vunpack.c.l.b16 %v258
    %v1402 = vunpack.c.l.b16 %v259
    %v1403 = vunpack.c.l.b16 %v260
    %v1404 = vunpack.c.l.b16 %v261
    %v1405 = vunpack.c.l.b16 %v262
    %v1406 = vunpack.c.l.b16 %v263
    %v1407 = vunpack.c.l.b16 %v264
    %v1408 = vunpack.c.l.b16 %v265
    %v1409 = vunpack.c.l.b16 %v266
    %v1410 = vunpack.c.l.b16 %v267
    %v1411 = vunpack.c.l.b16 %v268
    %v1412 = vunpack.c.l.b16 %v269
    %v1413 = vunpack.c.l.b16 %v270
    %v1414 = vunpack.c.l.b16 %v271
    %v1415 = vunpack.c.l.b16 %v272
    %v1416 = vunpack.c.l.b16 %v273
    %v1417 = vunpack.c.l.b16 %v274
    %v1418 = vunpack.c.l.b16 %v275
    %v1419 = vunpack.c.l.b16 %v276
    %v1420 = vunpack.c.l.b16 %v277
    %v1421 = vunpack.c.l.b16 %v278
    %v1422 = vunpack.c.l.b16 %v279
    %v1423 = vunpack.c.l.b16 %v280
    %v1424 = vunpack.c.l.b16 %v281
    %v1425 = vunpack.c.l.b16 %v282
    %v1426 = vunpack.c.l.b16 %v283
    %v1427 = vunpack.c.l.b16 %v284
    %v1428 = vunpack.c.l.b16 %v285
    %v1429 = vunpack.c.l.b16 %v286
    %v1430 = vunpack.c.l.b16 %v287
    %v1431 = vunpack.c.l.b16 %v288
    %v1432 = vunpack.c.l.b16 %v289
    %v1433 = vunpack.c.l.b16 %v290
    %v1434 = vunpack.c.l.b16 %v291
    %v1435 = vunpack.c.l.b16 %v292
    %v1436 = vunpack.c.l.b16 %v293
    %v1437 = vunpack.c.l.b16 %v294
    %v1438 = vunpack.c.l.b16 %v295
    %v1439 = vunpack.c.l.b16 %v296
    %v1440 = vunpack.c.l.b16 %v297
    %v1441 = vunpack.c.l.b16 %v298
    %v1442 = vunpack.c.l.b16 %v299
    %v1443 = vunpack.c.l.b16 %v300
    %v1444 = vunpack.c.l.b16 %v301
    %v1445 = vunpack.c.l.b16 %v302
    %v1446 = vunpack.c.l.b16 %v303
    %v1447 = vunpack.c.l.b16 %v304
    %v1448 = vunpack.c.l.b16 %v305
    %v1449 = vunpack.c.l.b16 %v306
    %v1450 = vunpack.c.l.b16 %v307
    %v1451 = vunpack.c.l.b16 %v308
    %v1452 = vunpack.c.l.b16 %v309
    %v1453 = vunpack.c.l.b16 %v310
    %v1454 = vunpack.c.l.b16 %v311
    %v1455 = vunpack.c.l.b16 %v312
    %v1456 = vunpack.c.l.b16 %v313
    %v1457 = vunpack.c.l.b16 %v314
    %v1458 = vunpack.c.l.b16 %v315
    %v1459 = vunpack.c.l.b16 %v316
    %v1460 = vunpack.c.l.b16 %v317
    %v1461 = vunpack.c.l.b16 %v318
    %v1462 = vunpack.c.l.b16 %v319
    %v1463 = vunpack.c.l.b16 %v320
    %v1464 = vunpack.c.l.b16 %v321
    %v1465 = vunpack.c.l.b16 %v322
    %v1466 = vunpack.c.l.b16 %v323
    %v1467 = vunpack.c.l.b16 %v324
    %v1468 = vunpack.c.l.b16 %v325
    %v1469 = vunpack.c.l.b16 %v326
    %v1470 = vunpack.c.l.b16 %v327
    %v1471 = vunpack.c.l.b16 %v328
    %v1472 = vunpack.c.l.b16 %v329
    %v1473 = vunpack.c.l.b16 %v330
    %v1474 = vunpack.c.l.b16 %v331
    %v1475 = vunpack.c.l.b16 %v332
    %v1476 = vunpack.c.l.b16 %v333
    %v1477 = vunpack.c.l.b16 %v334
    %v1478 = vunpack.c.l.b16 %v335
    %v1479 = vunpack.c.l.b16 %v336
    %v1480 = vunpack.c.l.b16 %v337
    %v1481 = vunpack.c.l.b16 %v338
    %v1482 = vunpack.c.l.b16 %v339
    %v1483 = vunpack.c.l.b16 %v340
    %v1484 = vunpack.c.l.b16 %v341
    %v1485 = vunpack.c.l.b16 %v342
    %v1486 = vunpack.c.l.b16 %v343
    %v1487 = vunpack.c.l.b16 %v344
    %v1488 = vunpack.c.l.b16 %v345
    %v1489 = vunpack.c.l.b16 %v346
    %v1490 = vunpack.c.l.b16 %v347
    %v1491 = vunpack.c.l.b16 %v348
    %v1492 = vunpack.c.l.b16 %v349
    %v1493 = vunpack.c.l.b16 %v350
    %v1494 = vunpack.c.l.b16 %v351
    %v1495 = vunpack.c.l.b16 %v352
    %v1496 = vunpack.c.l.b16 %v353
    %v1497 = vunpack.c.l.b16 %v354
    %v1498 = vunpack.c.l.b16 %v355
    %v1499 = vunpack.c.l.b16 %v356
    %v1500 = vunpack.c.l.b16 %v357
    %v1501 = vunpack.c.l.b16 %v358
    %v1502 = vunpack.c.l.b16 %v359
    %v1503 = vunpack.c.l.b16 %v360
    %v1504 = vunpack.c.l.b16 %v361
    %v1505 = vunpack.c.l.b16 %v362
    %v1506 = vunpack.c.l.b16 %v363
    %v1507 = vunpack.c.l.b16 %v364
    %v1508 = vunpack.c.l.b16 %v365
    %v1509 = vunpack.c.l.b16 %v366
    %v1510 = vunpack.c.l.b16 %v367
    %v1511 = vunpack.c.l.b16 %v368
    %v1512 = vunpack.c.l.b16 %v369
    %v1513 = vunpack.c.l.b16 %v370
    %v1514 = vunpack.c.l.b16 %v371
    %v1515 = vunpack.c.l.b16 %v372
    %v1516 = vunpack.c.l.b16 %v373
    %v1517 = vunpack.c.l.b16 %v374
    %v1518 = vunpack.c.l.b16 %v375
    %v1519 = vunpack.c.l.b16 %v376
    %v1520 = vunpack.c.l.b16 %v377
    %v1521 = vunpack.c.l.b16 %v378
    %v1522 = vunpack.c.l.b16 %v379
    %v1523 = vunpack.c.l.b16 %v380
    %v1524 = vunpack.c.l.b16 %v381
    %v1525 = vunpack.c.l.b16 %v382
    %v1526 = vunpack.c.l.b16 %v383
    %v1527 = vunpack.c.l.b16 %v384
    %v1528 = vunpack.c.l.b16 %v385
    %v1529 = vunpack.c.l.b16 %v386
    %v1530 = vunpack.c.l.b16 %v387
    %v1531 = vunpack.c.l.b16 %v388
    %v1532 = vunpack.c.l.b16 %v389
    %v1533 = vunpack.c.l.b16 %v390
    %v1534 = vunpack.c.l.b16 %v391
    %v1535 = vunpack.c.l.b16 %v392
    %v1536 = vunpack.c.l.b16 %v393
    %v1537 = vunpack.c.l.b16 %v394
    %v1538 = vunpack.c.l.b16 %v395
    %v1539 = vunpack.c.l.b16 %v396
    %v1540 = vunpack.c.l.b16 %v397
    %v1541 = vunpack.c.l.b16 %v398
    %v1542 = vunpack.c.l.b16 %v399
    %v1543 = vunpack.c.l.b16 %v400
    %v1544 = vunpack.c.l.b16 %v401
    %v1545 = vunpack.c.l.b16 %v402
    %v1546 = vunpack.c.l.b16 %v403
    %v1547 = vunpack.c.l.b16 %v404
    %v1548 = vunpack.c.l.b16 %v405
    %v1549 = vunpack.c.l.b16 %v406
    %v1550 = vunpack.c.l.b16 %v407
    %v1551 = vunpack.c.l.b16 %v408
    %v1552 = vunpack.c.l.b16 %v409
    %v1553 = vunpack.c.l.b16 %v410
    %v1554 = vunpack.c.l.b16 %v411
    %v1555 = vunpack.c.l.b16 %v412
    %v1556 = vunpack.c.l.b16 %v413
    %v1557 = vunpack.c.l.b16 %v414
    %v1558 = vunpack.c.l.b16 %v415
    %v1559 = vunpack.c.l.b16 %v416
    %v1560 = vunpack.c.l.b16 %v417
    %v1561 = vunpack.c.l.b16 %v418
    %v1562 = vunpack.c.l.b16 %v419
    %v1563 = vunpack.c.l.b16 %v420
    %v1564 = vunpack.c.l.b16 %v421
    %v1565 = vunpack.c.l.b16 %v422
    %v1566 = vunpack.c.l.b16 %v423
    %v1567 = vunpack.c.l.b16 %v424
    %v1568 = vunpack.c.l.b16 %v425
    %v1569 = vunpack.c.l.b16 %v426
    %v1570 = vunpack.c.l.b16 %v427
    %v1571 = vunpack.c.l.b16 %v428
    %v1572 = vunpack.c.l.b16 %v429
    %v1573 = vunpack.c.l.b16 %v430
    %v1574 = vunpack.c.l.b16 %v431
    %v1575 = vunpack.c.l.b16 %v432
    %v1576 = vunpack.c.l.b16 %v433
    %v1577 = vunpack.c.l.b16 %v434
    %v1578 = vunpack.c.l.b16 %v435
    %v1579 = vunpack.c.l.b16 %v436
    %v1580 = vunpack.c.l.b16 %v437
    %v1581 = vunpack.c.l.b16 %v438
    %v1582 = vunpack.c.l.b16 %v439
    %v1583 = vunpack.c.l.b16 %v440
    %v1584 = vunpack.c.l.b16 %v441
    %v1585 = vunpack.c.l.b16 %v442
    %v1586 = vunpack.c.l.b16 %v443
    %v1587 = vunpack.c.l.b16 %v444
    %v1588 = vunpack.c.l.b16 %v445
    %v1589 = vunpack.c.l.b16 %v446
    %v1590 = vunpack.c.l.b16 %v447
    %v1591 = vunpack.c.l.b16 %v448
    %v1592 = vunpack.c.l.b16 %v449
    %v1593 = vunpack.c.l.b16 %v450
    %v1594 = vunpack.c.l.b16 %v451
    %v1595 = vunpack.c.l.b16 %v452
    %v1596 = vunpack.c.l.b16 %v453
    %v1597 = vunpack.c.l.b16 %v454
    %v1598 = vunpack.c.l.b16 %v455
    %v1599 = vunpack.c.l.b16 %v456
    %v1600 = vunpack.c.l.b16 %v457
    %v1601 = vunpack.c.l.b16 %v458
    %v1602 = vunpack.c.l.b16 %v459
    %v1603 = vunpack.c.l.b16 %v460
    %v1604 = vunpack.c.l.b16 %v461
    %v1605 = vunpack.c.l.b16 %v462
    %v1606 = vunpack.c.l.b16 %v463
    %v1607 = vunpack.c.l.b16 %v464
    %v1608 = vunpack.c.l.b16 %v465
    %v1609 = vunpack.c.l.b16 %v466
    %v1610 = vunpack.c.l.b16 %v467
    %v1611 = vunpack.c.l.b16 %v468
    %v1612 = vunpack.c.l.b16 %v469
    %v1613 = vunpack.c.l.b16 %v470
    %v1614 = vunpack.c.l.b16 %v471
    %v1615 = vunpack.c.l.b16 %v472
    %v1616 = vunpack.c.l.b16 %v473
    %v1617 = vunpack.c.l.b16 %v474
    %v1618 = vunpack.c.l.b16 %v475
    %v1619 = vunpack.c.l.b16 %v476
    %v1620 = vunpack.c.l.b16 %v477
    %v1621 = vunpack.c.l.b16 %v478
    %v1622 = vunpack.c.l.b16 %v479
    %v1623 = vunpack.c.l.b16 %v480
    %v1624 = vunpack.c.l.b16 %v481
    %v1625 = vunpack.c.l.b16 %v482
    %v1626 = vunpack.c.l.b16 %v483
    %v1627 = vunpack.c.l.b16 %v484
    %v1628 = vunpack.c.l.b16 %v485
    %v1629 = vunpack.c.l.b16 %v486
    %v1630 = vunpack.c.l.b16 %v487
    %v1631 = vunpack.c.l.b16 %v488
    %v1632 = vunpack.c.l.b16 %v489
    %v1633 = vunpack.c.l.b16 %v490
    %v1634 = vunpack.c.l.b16 %v491
    %v1635 = vunpack.c.l.b16 %v492
    %v1636 = vunpack.c.l.b16 %v493
    %v1637 = vunpack.c.l.b16 %v494
    %v1638 = vunpack.c.l.b16 %v495
    %v1639 = vunpack.c.l.b16 %v496
    %v1640 = vunpack.c.l.b16 %v497
    %v1641 = vunpack.c.l.b16 %v498
    %v1642 = vunpack.c.l.b16 %v499
    %v1643 = vunpack.c.l.b16 %v500
    %v1644 = vunpack.c.l.b16 %v501
    %v1645 = vunpack.c.l.b16 %v502
    %v1646 = vunpack.c.l.b16 %v503
    %v1647 = vunpack.c.l.b16 %v504
    %v1648 = vunpack.c.l.b16 %v505
    %v1649 = vunpack.c.l.b16 %v506
    %v1650 = vunpack.c.l.b16 %v507
    %v1651 = vunpack.c.l.b16 %v508
    %v1652 = vunpack.c.l.b16 %v509
    %v1653 = vunpack.c.l.b16 %v510
    %v1654 = vunpack.c.l.b16 %v511
    %v1655 = vunpack.c.l.b16 %v512
    %v1656 = vunpack.c.l.b16 %v513
    %v1657 = vunpack.c.l.b16 %v514
    %v1658 = vunpack.c.l.b16 %v515
    %v1659 = vunpack.c.l.b16 %v516
    %v1660 = vunpack.c.l.b16 %v517
    %v1661 = vunpack.c.l.b16 %v518
    %v1662 = vunpack.c.l.b16 %v519
    %v1663 = vunpack.c.l.b16 %v520
    %v1664 = vunpack.c.l.b16 %v521
    %v1665 = vunpack.c.l.b16 %v522
    %v1666 = vunpack.c.l.b16 %v523
    %v1667 = vunpack.c.l.b16 %v524
    %v1668 = vunpack.c.l.b16 %v525
    %v1669 = vunpack.c.l.b16 %v526
    %v1670 = vunpack.c.l.b16 %v527
    %v1671 = vunpack.c.l.b16 %v528
    %v1672 = vunpack.c.l.b16 %v529
    %v1673 = vunpack.c.l.b16 %v530
    %v1674 = vunpack.c.l.b16 %v531
    %v1675 = vunpack.c.l.b16 %v532
    %v1676 = vunpack.c.l.b16 %v533
    %v1677 = vunpack.c.l.b16 %v534
    %v1678 = vunpack.c.l.b16 %v535
    %v1679 = vunpack.c.l.b16 %v536
    %v1680 = vunpack.c.l.b16 %v537
    %v1681 = vunpack.c.l.b16 %v538
    %v1682 = vunpack.c.l.b16 %v539
    %v1683 = vunpack.c.l.b16 %v540
    %v1684 = vunpack.c.l.b16 %v541
    %v1685 = vunpack.c.l.b16 %v542
    %v1686 = vunpack.c.l.b16 %v543
    %v1687 = vunpack.c.l.b16 %v544
    %v1688 = vunpack.c.l.b16 %v545
    %v1689 = vunpack.c.l.b16 %v546
    %v1690 = vunpack.c.l.b16 %v547
    %v1691 = vunpack.c.l.b16 %v548
    %v1692 = vunpack.c.l.b16 %v549
    %v1693 = vunpack.c.l.b16 %v550
    %v1694 = vunpack.c.l.b16 %v551
    %v1695 = vunpack.c.l.b16 %v552
    %v1696 = vunpack.c.l.b16 %v553
    %v1697 = vunpack.c.l.b16 %v554
    %v1698 = vunpack.c.l.b16 %v555
    %v1699 = vunpack.c.l.b16 %v556
    %v1700 = vunpack.c.l.b16 %v557
    %v1701 = vunpack.c.l.b16 %v558
    %v1702 = vunpack.c.l.b16 %v559
    %v1703 = vunpack.c.l.b16 %v560
    %v1704 = vunpack.c.l.b16 %v561
    %v1705 = vunpack.c.l.b16 %v562
    %v1706 = vunpack.c.l.b16 %v563
    %v1707 = vunpack.c.l.b16 %v564
    %v1708 = vunpack.c.l.b16 %v565
    %v1709 = vunpack.c.l.b16 %v566
    %v1710 = vunpack.c.l.b16 %v567
    %v1711 = vunpack.c.l.b16 %v568
    %v1712 = vunpack.c.l.b16 %v569
    %v1713 = vunpack.c.l.b16 %v570
    %v1714 = vunpack.c.l.b16 %v571
    %v1715 = vunpack.c.l.b16 %v572
    %v1716 = vunpack.c.l.b16 %v573
    %v1717 = vpack.c.b16 %v1206, %v1205
    %v1718 = vpack.c.b16 %v1208, %v1207
    %v1719 = vpack.c.b16 %v1210, %v1209
    %v1720 = vpack.c.b16 %v1212, %v1211
    %v1721 = vpack.c.b16 %v1214, %v1213
    %v1722 = vpack.c.b16 %v1216, %v1215
    %v1723 = vpack.c.b16 %v1218, %v1217
    %v1724 = vpack.c.b16 %v1220, %v1219
    %v1725 = vpack.c.b16 %v1222, %v1221
    %v1726 = vpack.c.b16 %v1224, %v1223
    %v1727 = vpack.c.b16 %v1226, %v1225
    %v1728 = vpack.c.b16 %v1228, %v1227
    %v1729 = vpack.c.b16 %v1230, %v1229
    %v1730 = vpack.c.b16 %v1232, %v1231
    %v1731 = vpack.c.b16 %v1234, %v1233
    %v1732 = vpack.c.b16 %v1236, %v1235
    %v1733 = vpack.c.b16 %v1238, %v1237
    %v1734 = vpack.c.b16 %v1240, %v1239
    %v1735 = vpack.c.b16 %v1242, %v1241
    %v1736 = vpack.c.b16 %v1244, %v1243
    %v1737 = vpack.c.b16 %v1246, %v1245
    %v1738 = vpack.c.b16 %v1248, %v1247
    %v1739 = vpack.c.b16 %v1250, %v1249
    %v1740 = vpack.c.b16 %v1252, %v1251
    %v1741 = vpack.c.b16 %v1254, %v1253
    %v1742 = vpack.c.b16 %v1256, %v1255
    %v1743 = vpack.c.b16 %v1258, %v1257
    %v1744 = vpack.c.b16 %v1260, %v1259
    %v1745 = vpack.c.b16 %v1262, %v1261
    %v1746 = vpack.c.b16 %v1264, %v1263
    %v1747 = vpack.c.b16 %v1266, %v1265
    %v1748 = vpack.c.b16 %v1268, %v1267
    %v1749 = vpack.c.b16 %v1270, %v1269
    %v1750 = vpack.c.b16 %v1272, %v1271
    %v1751 = vpack.c.b16 %v1274, %v1273
    %v1752 = vpack.c.b16 %v1276, %v1275
    %v1753 = vpack.c.b16 %v1278, %v1277
    %v1754 = vpack.c.b16 %v1280, %v1279
    %v1755 = vpack.c.b16 %v1282, %v1281
    %v1756 = vpack.c.b16 %v1284, %v1283
    %v1757 = vpack.c.b16 %v1286, %v1285
    %v1758 = vpack.c.b16 %v1288, %v1287
    %v1759 = vpack.c.b16 %v1290, %v1289
    %v1760 = vpack.c.b16 %v1292, %v1291
    %v1761 = vpack.c.b16 %v1294, %v1293
    %v1762 = vpack.c.b16 %v1296, %v1295
    %v1763 = vpack.c.b16 %v1298, %v1297
    %v1764 = vpack.c.b16 %v1300, %v1299
    %v1765 = vpack.c.b16 %v1302, %v1301
    %v1766 = vpack.c.b16 %v1304, %v1303
    %v1767 = vpack.c.b16 %v1306, %v1305
    %v1768 = vpack.c.b16 %v1308, %v1307
    %v1769 = vpack.c.b16 %v1310, %v1309
    %v1770 = vpack.c.b16 %v1312, %v1311
    %v1771 = vpack.c.b16 %v1314, %v1313
    %v1772 = vpack.c.b16 %v1316, %v1315
    %v1773 = vpack.c.b16 %v1318, %v1317
    %v1774 = vpack.c.b16 %v1320, %v1319
    %v1775 = vpack.c.b16 %v1322, %v1321
    %v1776 = vpack.c.b16 %v1324, %v1323
    %v1777 = vpack.c.b16 %v1326, %v1325
    %v1778 = vpack.c.b16 %v1328, %v1327
    %v1779 = vpack.c.b16 %v1330, %v1329
    %v1780 = vpack.c.b16 %v1332, %v1331
    %v1781 = vpack.c.b16 %v1334, %v1333
    %v1782 = vpack.c.b16 %v1336, %v1335
    %v1783 = vpack.c.b16 %v1338, %v1337
    %v1784 = vpack.c.b16 %v1340, %v1339
    %v1785 = vpack.c.b16 %v1342, %v1341
    %v1786 = vpack.c.b16 %v1344, %v1343
    %v1787 = vpack.c.b16 %v1346, %v1345
    %v1788 = vpack.c.b16 %v1348, %v1347
    %v1789 = vpack.c.b16 %v1350, %v1349
    %v1790 = vpack.c.b16 %v1352, %v1351
    %v1791 = vpack.c.b16 %v1354, %v1353
    %v1792 = vpack.c.b16 %v1356, %v1355
    %v1793 = vpack.c.b16 %v1358, %v1357
    %v1794 = vpack.c.b16 %v1360, %v1359
    %v1795 = vpack.c.b16 %v1362, %v1361
    %v1796 = vpack.c.b16 %v1364, %v1363
    %v1797 = vpack.c.b16 %v1366, %v1365
    %v1798 = vpack.c.b16 %v1368, %v1367
    %v1799 = vpack.c.b16 %v1370, %v1369
    %v1800 = vpack.c.b16 %v1372, %v1371
    %v1801 = vpack.c.b16 %v1374, %v1373
    %v1802 = vpack.c.b16 %v1376, %v1375
    %v1803 = vpack.c.b16 %v1378, %v1377
    %v1804 = vpack.c.b16 %v1380, %v1379
    %v1805 = vpack.c.b16 %v1382, %v1381
    %v1806 = vpack.c.b16 %v1384, %v1383
    %v1807 = vpack.c.b16 %v1386, %v1385
    %v1808 = vpack.c.b16 %v1388, %v1387
    %v1809 = vpack.c.b16 %v1390, %v1389
    %v1810 = vpack.c.b16 %v1392, %v1391
    %v1811 = vpack.c.b16 %v1394, %v1393
    %v1812 = vpack.c.b16 %v1396, %v1395
    %v1813 = vpack.c.b16 %v1398, %v1397
    %v1814 = vpack.c.b16 %v1400, %v1399
    %v1815 = vpack.c.b16 %v1402, %v1401
    %v1816 = vpack.c.b16 %v1404, %v1403
    %v1817 = vpack.c.b16 %v1406, %v1405
    %v1818 = vpack.c.b16 %v1408, %v1407
    %v1819 = vpack.c.b16 %v1410, %v1409
    %v1820 = vpack.c.b16 %v1412, %v1411
    %v1821 = vpack.c.b16 %v1414, %v1413
    %v1822 = vpack.c.b16 %v1416, %v1415
    %v1823 = vpack.c.b16 %v1418, %v1417
    %v1824 = vpack.c.b16 %v1420, %v1419
    %v1825 = vpack.c.b16 %v1422, %v1421
    %v1826 = vpack.c.b16 %v1424, %v1423
    %v1827 = vpack.c.b16 %v1426, %v1425
    %v1828 = vpack.c.b16 %v1428, %v1427
    %v1829 = vpack.c.b16 %v1430, %v1429
    %v1830 = vpack.c.b16 %v1432, %v1431
    %v1831 = vpack.c.b16 %v1434, %v1433
    %v1832 = vpack.c.b16 %v1436, %v1435
    %v1833 = vpack.c.b16 %v1438, %v1437
    %v1834 = vpack.c.b16 %v1440, %v1439
    %v1835 = vpack.c.b16 %v1442, %v1441
    %v1836 = vpack.c.b16 %v1444, %v1443
    %v1837 = vpack.c.b16 %v1446, %v1445
    %v1838 = vpack.c.b16 %v1448, %v1447
    %v1839 = vpack.c.b16 %v1450, %v1449
    %v1840 = vpack.c.b16 %v1452, %v1451
    %v1841 = vpack.c.b16 %v1454, %v1453
    %v1842 = vpack.c.b16 %v1456, %v1455
    %v1843 = vpack.c.b16 %v1458, %v1457
    %v1844 = vpack.c.b16 %v1460, %v1459
    %v1845 = vpack.c.b16 %v1462, %v1461
    %v1846 = vpack.c.b16 %v1464, %v1463
    %v1847 = vpack.c.b16 %v1466, %v1465
    %v1848 = vpack.c.b16 %v1468, %v1467
    %v1849 = vpack.c.b16 %v1470, %v1469
    %v1850 = vpack.c.b16 %v1472, %v1471
    %v1851 = vpack.c.b16 %v1474, %v1473
    %v1852 = vpack.c.b16 %v1476, %v1475
    %v1853 = vpack.c.b16 %v1478, %v1477
    %v1854 = vpack.c.b16 %v1480, %v1479
    %v1855 = vpack.c.b16 %v1482, %v1481
    %v1856 = vpack.c.b16 %v1484, %v1483
    %v1857 = vpack.c.b16 %v1486, %v1485
    %v1858 = vpack.c.b16 %v1488, %v1487
    %v1859 = vpack.c.b16 %v1490, %v1489
    %v1860 = vpack.c.b16 %v1492, %v1491
    %v1861 = vpack.c.b16 %v1494, %v1493
    %v1862 = vpack.c.b16 %v1496, %v1495
    %v1863 = vpack.c.b16 %v1498, %v1497
    %v1864 = vpack.c.b16 %v1500, %v1499
    %v1865 = vpack.c.b16 %v1502, %v1501
    %v1866 = vpack.c.b16 %v1504, %v1503
    %v1867 = vpack.c.b16 %v1506, %v1505
    %v1868 = vpack.c.b16 %v1508, %v1507
    %v1869 = vpack.c.b16 %v1510, %v1509
    %v1870 = vpack.c.b16 %v1512, %v1511
    %v1871 = vpack.c.b16 %v1514, %v1513
    %v1872 = vpack.c.b16 %v1516, %v1515
    %v1873 = vpack.c.b16 %v1518, %v1517
    %v1874 = vpack.c.b16 %v1520, %v1519
    %v1875 = vpack.c.b16 %v1522, %v1521
    %v1876 = vpack.c.b16 %v1524, %v1523
    %v1877 = vpack.c.b16 %v1526, %v1525
    %v1878 = vpack.c.b16 %v1528, %v1527
    %v1879 = vpack.c.b16 %v1530, %v1529
    %v1880 = vpack.c.b16 %v1532, %v1531
    %v1881 = vpack.c.b16 %v1534, %v1533
    %v1882 = vpack.c.b16 %v1536, %v1535
    %v1883 = vpack.c.b16 %v1538, %v1537
    %v1884 = vpack.c.b16 %v1540, %v1539
    %v1885 = vpack.c.b16 %v1542, %v1541
    %v1886 = vpack.c.b16 %v1544, %v1543
    %v1887 = vpack.c.b16 %v1546, %v1545
    %v1888 = vpack.c.b16 %v1548, %v1547
    %v1889 = vpack.c.b16 %v1550, %v1549
    %v1890 = vpack.c.b16 %v1552, %v1551
    %v1891 = vpack.c.b16 %v1554, %v1553
    %v1892 = vpack.c.b16 %v1556, %v1555
    %v1893 = vpack.c.b16 %v1558, %v1557
    %v1894 = vpack.c.b16 %v1560, %v1559
    %v1895 = vpack.c.b16 %v1562, %v1561
    %v1896 = vpack.c.b16 %v1564, %v1563
    %v1897 = vpack.c.b16 %v1566, %v1565
    %v1898 = vpack.c.b16 %v1568, %v1567
    %v1899 = vpack.c.b16 %v1570, %v1569
    %v1900 = vpack.c.b16 %v1572, %v1571
    %v1901 = vpack.c.b16 %v1574, %v1573
    %v1902 = vpack.c.b16 %v1576, %v1575
    %v1903 = vpack.c.b16 %v1578, %v1577
    %v1904 = vpack.c.b16 %v1580, %v1579
    %v1905 = vpack.c.b16 %v1582, %v1581
    %v1906 = vpack.c.b16 %v1584, %v1583
    %v1907 = vpack.c.b16 %v1586, %v1585
    %v1908 = vpack.c.b16 %v1588, %v1587
    %v1909 = vpack.c.b16 %v1590, %v1589
    %v1910 = vpack.c.b16 %v1592, %v1591
    %v1911 = vpack.c.b16 %v1594, %v1593
    %v1912 = vpack.c.b16 %v1596, %v1595
    %v1913 = vpack.c.b16 %v1598, %v1597
    %v1914 = vpack.c.b16 %v1600, %v1599
    %v1915 = vpack.c.b16 %v1602, %v1601
    %v1916 = vpack.c.b16 %v1604, %v1603
    %v1917 = vpack.c.b16 %v1606, %v1605
    %v1918 = vpack.c.b16 %v1608, %v1607
    %v1919 = vpack.c.b16 %v1610, %v1609
    %v1920 = vpack.c.b16 %v1612, %v1611
    %v1921 = vpack.c.b16 %v1614, %v1613
    %v1922 = vpack.c.b16 %v1616, %v1615
    %v1923 = vpack.c.b16 %v1618, %v1617
    %v1924 = vpack.c.b16 %v1620, %v1619
    %v1925 = vpack.c.b16 %v1622, %v1621
    %v1926 = vpack.c.b16 %v1624, %v1623
    %v1927 = vpack.c.b16 %v1626, %v1625
    %v1928 = vpack.c.b16 %v1628, %v1627
    %v1929 = vpack.c.b16 %v1630, %v1629
    %v1930 = vpack.c.b16 %v1632, %v1631
    %v1931 = vpack.c.b16 %v1634, %v1633
    %v1932 = vpack.c.b16 %v1636, %v1635
    %v1933 = vpack.c.b16 %v1638, %v1637
    %v1934 = vpack.c.b16 %v1640, %v1639
    %v1935 = vpack.c.b16 %v1642, %v1641
    %v1936 = vpack.c.b16 %v1644, %v1643
    %v1937 = vpack.c.b16 %v1646, %v1645
    %v1938 = vpack.c.b16 %v1648, %v1647
    %v1939 = vpack.c.b16 %v1650, %v1649
    %v1940 = vpack.c.b16 %v1652, %v1651
    %v1941 = vpack.c.b16 %v1654, %v1653
    %v1942 = vpack.c.b16 %v1656, %v1655
    %v1943 = vpack.c.b16 %v1658, %v1657
    %v1944 = vpack.c.b16 %v1660, %v1659
    %v1945 = vpack.c.b16 %v1662, %v1661
    %v1946 = vpack.c.b16 %v1664, %v1663
    %v1947 = vpack.c.b16 %v1666, %v1665
    %v1948 = vpack.c.b16 %v1668, %v1667
    %v1949 = vpack.c.b16 %v1670, %v1669
    %v1950 = vpack.c.b16 %v1672, %v1671
    %v1951 = vpack.c.b16 %v1674, %v1673
    %v1952 = vpack.c.b16 %v1676, %v1675
    %v1953 = vpack.c.b16 %v1678, %v1677
    %v1954 = vpack.c.b16 %v1680, %v1679
    %v1955 = vpack.c.b16 %v1682, %v1681
    %v1956 = vpack.c.b16 %v1684, %v1683
    %v1957 = vpack.c.b16 %v1686, %v1685
    %v1958 = vpack.c.b16 %v1688, %v1687
    %v1959 = vpack.c.b16 %v1690, %v1689
    %v1960 = vpack.c.b16 %v1692, %v1691
    %v1961 = vpack.c.b16 %v1694, %v1693
    %v1962 = vpack.c.b16 %v1696, %v1695
    %v1963 = vpack.c.b16 %v1698, %v1697
    %v1964 = vpack.c.b16 %v1700, %v1699
    %v1965 = vpack.c.b16 %v1702, %v1701
    %v1966 = vpack.c.b16 %v1704, %v1703
    %v1967 = vpack.c.b16 %v1706, %v1705
    %v1968 = vpack.c.b16 %v1708, %v1707
    %v1969 = vpack.c.b16 %v1710, %v1709
    %v1970 = vpack.c.b16 %v1712, %v1711
    %v1971 = vpack.c.b16 %v1714, %v1713
    %v1972 = vpack.c.b16 %v1716, %v1715
    %2229 = vmatprep.subr.bf16.mxu0 0
    %2230 = vmatpush1.bf16.msra.mxu0 %v1717
    %2231 = vmatprep.subr.bf16.mxu0 0
    %2232 = vmatpush1.bf16.msra.mxu0 %v1718
    %2233 = vmatprep.subr.bf16.mxu0 0
    %2234 = vmatpush1.bf16.msra.mxu0 %v1719
    %2235 = vmatprep.subr.bf16.mxu0 0
    %2236 = vmatpush1.bf16.msra.mxu0 %v1720
    %2237 = vmatprep.subr.bf16.mxu0 0
    %2238 = vmatpush1.bf16.msra.mxu0 %v1721
    %2239 = vmatprep.subr.bf16.mxu0 0
    %2240 = vmatpush1.bf16.msra.mxu0 %v1722
    %2241 = vmatprep.subr.bf16.mxu0 0
    %2242 = vmatpush1.bf16.msra.mxu0 %v1723
    %2243 = vmatprep.subr.bf16.mxu0 0
    %2244 = vmatpush1.bf16.msra.mxu0 %v1724
    %2245 = vmatprep.subr.bf16.mxu0 0
    %2246 = vmatpush1.bf16.msra.mxu0 %v1725
    %2247 = vmatprep.subr.bf16.mxu0 0
    %2248 = vmatpush1.bf16.msra.mxu0 %v1726
    %2249 = vmatprep.subr.bf16.mxu0 0
    %2250 = vmatpush1.bf16.msra.mxu0 %v1727
    %2251 = vmatprep.subr.bf16.mxu0 0
    %2252 = vmatpush1.bf16.msra.mxu0 %v1728
    %2253 = vmatprep.subr.bf16.mxu0 0
    %2254 = vmatpush1.bf16.msra.mxu0 %v1729
    %2255 = vmatprep.subr.bf16.mxu0 0
    %2256 = vmatpush1.bf16.msra.mxu0 %v1730
    %2257 = vmatprep.subr.bf16.mxu0 0
    %2258 = vmatpush1.bf16.msra.mxu0 %v1731
    %2259 = vmatprep.subr.bf16.mxu0 0
    %2260 = vmatpush1.bf16.msra.mxu0 %v1732
    %2261 = vmatprep.mubr.bf16.mxu0 %v630
    %2262 = vmatmul.mubr.bf16.gmra.mrb[0].mxu0 %v629
    %v2263 = vpop.f32.mrb[0].mxu0
    %v2264 = vadd.f32 %v579, %v2263
    %v2265 = vpop.f32.mrb[0].mxu0
    %v2266 = vpop.f32.mrb[0].mxu0
    %v2267 = vpop.f32.mrb[0].mxu0
    %2268 = vdwg.mxu0
    %2269 = vmatprep.subr.bf16.mxu0 0
    %2270 = vmatpush1.bf16.msra.mxu0 %v1733
    %2271 = vmatprep.subr.bf16.mxu0 0
    %2272 = vmatpush1.bf16.msra.mxu0 %v1734
    %2273 = vmatprep.subr.bf16.mxu0 0
    %2274 = vmatpush1.bf16.msra.mxu0 %v1735
    %2275 = vmatprep.subr.bf16.mxu0 0
    %2276 = vmatpush1.bf16.msra.mxu0 %v1736
    %2277 = vmatprep.subr.bf16.mxu0 0
    %2278 = vmatpush1.bf16.msra.mxu0 %v1737
    %2279 = vmatprep.subr.bf16.mxu0 0
    %2280 = vmatpush1.bf16.msra.mxu0 %v1738
    %2281 = vmatprep.subr.bf16.mxu0 0
    %2282 = vmatpush1.bf16.msra.mxu0 %v1739
    %2283 = vmatprep.subr.bf16.mxu0 0
    %2284 = vmatpush1.bf16.msra.mxu0 %v1740
    %2285 = vmatprep.subr.bf16.mxu0 0
    %2286 = vmatpush1.bf16.msra.mxu0 %v1741
    %2287 = vmatprep.subr.bf16.mxu0 0
    %2288 = vmatpush1.bf16.msra.mxu0 %v1742
    %2289 = vmatprep.subr.bf16.mxu0 0
    %2290 = vmatpush1.bf16.msra.mxu0 %v1743
    %2291 = vmatprep.subr.bf16.mxu0 0
    %2292 = vmatpush1.bf16.msra.mxu0 %v1744
    %2293 = vmatprep.subr.bf16.mxu0 0
    %2294 = vmatpush1.bf16.msra.mxu0 %v1745
    %2295 = vmatprep.subr.bf16.mxu0 0
    %2296 = vmatpush1.bf16.msra.mxu0 %v1746
    %2297 = vmatprep.subr.bf16.mxu0 0
    %2298 = vmatpush1.bf16.msra.mxu0 %v1747
    %2299 = vmatprep.subr.bf16.mxu0 0
    %2300 = vmatpush1.bf16.msra.mxu0 %v1748
    %2301 = vmatprep.mubr.bf16.mxu0 %v632
    %2302 = vmatmul.mubr.bf16.gmra.mrb[0].mxu0 %v631
    %v2303 = vpop.f32.mrb[0].mxu0
    %v2304 = vadd.f32 %v2264, %v2303
    %v2305 = vpop.f32.mrb[0].mxu0
    %v2306 = vpop.f32.mrb[0].mxu0
    %v2307 = vpop.f32.mrb[0].mxu0
    %2308 = vdwg.mxu0
    %2309 = vmatprep.subr.bf16.mxu0 0
    %2310 = vmatpush1.bf16.msra.mxu0 %v1749
    %2311 = vmatprep.subr.bf16.mxu0 0
    %2312 = vmatpush1.bf16.msra.mxu0 %v1750
    %2313 = vmatprep.subr.bf16.mxu0 0
    %2314 = vmatpush1.bf16.msra.mxu0 %v1751
    %2315 = vmatprep.subr.bf16.mxu0 0
    %2316 = vmatpush1.bf16.msra.mxu0 %v1752
    %2317 = vmatprep.subr.bf16.mxu0 0
    %2318 = vmatpush1.bf16.msra.mxu0 %v1753
    %2319 = vmatprep.subr.bf16.mxu0 0
    %2320 = vmatpush1.bf16.msra.mxu0 %v1754
    %2321 = vmatprep.subr.bf16.mxu0 0
    %2322 = vmatpush1.bf16.msra.mxu0 %v1755
    %2323 = vmatprep.subr.bf16.mxu0 0
    %2324 = vmatpush1.bf16.msra.mxu0 %v1756
    %2325 = vmatprep.subr.bf16.mxu0 0
    %2326 = vmatpush1.bf16.msra.mxu0 %v1757
    %2327 = vmatprep.subr.bf16.mxu0 0
    %2328 = vmatpush1.bf16.msra.mxu0 %v1758
    %2329 = vmatprep.subr.bf16.mxu0 0
    %2330 = vmatpush1.bf16.msra.mxu0 %v1759
    %2331 = vmatprep.subr.bf16.mxu0 0
    %2332 = vmatpush1.bf16.msra.mxu0 %v1760
    %2333 = vmatprep.subr.bf16.mxu0 0
    %2334 = vmatpush1.bf16.msra.mxu0 %v1761
    %2335 = vmatprep.subr.bf16.mxu0 0
    %2336 = vmatpush1.bf16.msra.mxu0 %v1762
    %2337 = vmatprep.subr.bf16.mxu0 0
    %2338 = vmatpush1.bf16.msra.mxu0 %v1763
    %2339 = vmatprep.subr.bf16.mxu0 0
    %2340 = vmatpush1.bf16.msra.mxu0 %v1764
    %2341 = vmatprep.mubr.bf16.mxu0 %v634
    %2342 = vmatmul.mubr.bf16.gmra.mrb[0].mxu0 %v633
    %v2343 = vpop.f32.mrb[0].mxu0
    %v2344 = vadd.f32 %v2304, %v2343
    %v2345 = vpop.f32.mrb[0].mxu0
    %v2346 = vpop.f32.mrb[0].mxu0
    %v2347 = vpop.f32.mrb[0].mxu0
    %2348 = vdwg.mxu0
    %2349 = vmatprep.subr.bf16.mxu0 0
    %2350 = vmatpush1.bf16.msra.mxu0 %v1765
    %2351 = vmatprep.subr.bf16.mxu0 0
    %2352 = vmatpush1.bf16.msra.mxu0 %v1766
    %2353 = vmatprep.subr.bf16.mxu0 0
    %2354 = vmatpush1.bf16.msra.mxu0 %v1767
    %2355 = vmatprep.subr.bf16.mxu0 0
    %2356 = vmatpush1.bf16.msra.mxu0 %v1768
    %2357 = vmatprep.subr.bf16.mxu0 0
    %2358 = vmatpush1.bf16.msra.mxu0 %v1769
    %2359 = vmatprep.subr.bf16.mxu0 0
    %2360 = vmatpush1.bf16.msra.mxu0 %v1770
    %2361 = vmatprep.subr.bf16.mxu0 0
    %2362 = vmatpush1.bf16.msra.mxu0 %v1771
    %2363 = vmatprep.subr.bf16.mxu0 0
    %2364 = vmatpush1.bf16.msra.mxu0 %v1772
    %2365 = vmatprep.subr.bf16.mxu0 0
    %2366 = vmatpush1.bf16.msra.mxu0 %v1773
    %2367 = vmatprep.subr.bf16.mxu0 0
    %2368 = vmatpush1.bf16.msra.mxu0 %v1774
    %2369 = vmatprep.subr.bf16.mxu0 0
    %2370 = vmatpush1.bf16.msra.mxu0 %v1775
    %2371 = vmatprep.subr.bf16.mxu0 0
    %2372 = vmatpush1.bf16.msra.mxu0 %v1776
    %2373 = vmatprep.subr.bf16.mxu0 0
    %2374 = vmatpush1.bf16.msra.mxu0 %v1777
    %2375 = vmatprep.subr.bf16.mxu0 0
    %2376 = vmatpush1.bf16.msra.mxu0 %v1778
    %2377 = vmatprep.subr.bf16.mxu0 0
    %2378 = vmatpush1.bf16.msra.mxu0 %v1779
    %2379 = vmatprep.subr.bf16.mxu0 0
    %2380 = vmatpush1.bf16.msra.mxu0 %v1780
    %2381 = vmatprep.mubr.bf16.mxu0 %v636
    %2382 = vmatmul.mubr.bf16.gmra.mrb[0].mxu0 %v635
    %v2383 = vpop.f32.mrb[0].mxu0
    %v2384 = vadd.f32 %v2344, %v2383
    %v2385 = vpop.f32.mrb[0].mxu0
    %v2386 = vpop.f32.mrb[0].mxu0
    %v2387 = vpop.f32.mrb[0].mxu0
    %2388 = vdwg.mxu0
    %2389 = vmatprep.subr.bf16.mxu0 0
    %2390 = vmatpush1.bf16.msra.mxu0 %v1781
    %2391 = vmatprep.subr.bf16.mxu0 0
    %2392 = vmatpush1.bf16.msra.mxu0 %v1782
    %2393 = vmatprep.subr.bf16.mxu0 0
    %2394 = vmatpush1.bf16.msra.mxu0 %v1783
    %2395 = vmatprep.subr.bf16.mxu0 0
    %2396 = vmatpush1.bf16.msra.mxu0 %v1784
    %2397 = vmatprep.subr.bf16.mxu0 0
    %2398 = vmatpush1.bf16.msra.mxu0 %v1785
    %2399 = vmatprep.subr.bf16.mxu0 0
    %2400 = vmatpush1.bf16.msra.mxu0 %v1786
    %2401 = vmatprep.subr.bf16.mxu0 0
    %2402 = vmatpush1.bf16.msra.mxu0 %v1787
    %2403 = vmatprep.subr.bf16.mxu0 0
    %2404 = vmatpush1.bf16.msra.mxu0 %v1788
    %2405 = vmatprep.subr.bf16.mxu0 0
    %2406 = vmatpush1.bf16.msra.mxu0 %v1789
    %2407 = vmatprep.subr.bf16.mxu0 0
    %2408 = vmatpush1.bf16.msra.mxu0 %v1790
    %2409 = vmatprep.subr.bf16.mxu0 0
    %2410 = vmatpush1.bf16.msra.mxu0 %v1791
    %2411 = vmatprep.subr.bf16.mxu0 0
    %2412 = vmatpush1.bf16.msra.mxu0 %v1792
    %2413 = vmatprep.subr.bf16.mxu0 0
    %2414 = vmatpush1.bf16.msra.mxu0 %v1793
    %2415 = vmatprep.subr.bf16.mxu0 0
    %2416 = vmatpush1.bf16.msra.mxu0 %v1794
    %2417 = vmatprep.subr.bf16.mxu0 0
    %2418 = vmatpush1.bf16.msra.mxu0 %v1795
    %2419 = vmatprep.subr.bf16.mxu0 0
    %2420 = vmatpush1.bf16.msra.mxu0 %v1796
    %2421 = vmatprep.mubr.bf16.mxu0 %v638
    %2422 = vmatmul.mubr.bf16.gmra.mrb[0].mxu0 %v637
    %v2423 = vpop.f32.mrb[0].mxu0
    %v2424 = vadd.f32 %v2384, %v2423
    %v2425 = vpop.f32.mrb[0].mxu0
    %v2426 = vpop.f32.mrb[0].mxu0
    %v2427 = vpop.f32.mrb[0].mxu0
    %2428 = vdwg.mxu0
    %2429 = vmatprep.subr.bf16.mxu0 0
    %2430 = vmatpush1.bf16.msra.mxu0 %v1797
    %2431 = vmatprep.subr.bf16.mxu0 0
    %2432 = vmatpush1.bf16.msra.mxu0 %v1798
    %2433 = vmatprep.subr.bf16.mxu0 0
    %2434 = vmatpush1.bf16.msra.mxu0 %v1799
    %2435 = vmatprep.subr.bf16.mxu0 0
    %2436 = vmatpush1.bf16.msra.mxu0 %v1800
    %2437 = vmatprep.subr.bf16.mxu0 0
    %2438 = vmatpush1.bf16.msra.mxu0 %v1801
    %2439 = vmatprep.subr.bf16.mxu0 0
    %2440 = vmatpush1.bf16.msra.mxu0 %v1802
    %2441 = vmatprep.subr.bf16.mxu0 0
    %2442 = vmatpush1.bf16.msra.mxu0 %v1803
    %2443 = vmatprep.subr.bf16.mxu0 0
    %2444 = vmatpush1.bf16.msra.mxu0 %v1804
    %2445 = vmatprep.subr.bf16.mxu0 0
    %2446 = vmatpush1.bf16.msra.mxu0 %v1805
    %2447 = vmatprep.subr.bf16.mxu0 0
    %2448 = vmatpush1.bf16.msra.mxu0 %v1806
    %2449 = vmatprep.subr.bf16.mxu0 0
    %2450 = vmatpush1.bf16.msra.mxu0 %v1807
    %2451 = vmatprep.subr.bf16.mxu0 0
    %2452 = vmatpush1.bf16.msra.mxu0 %v1808
    %2453 = vmatprep.subr.bf16.mxu0 0
    %2454 = vmatpush1.bf16.msra.mxu0 %v1809
    %2455 = vmatprep.subr.bf16.mxu0 0
    %2456 = vmatpush1.bf16.msra.mxu0 %v1810
    %2457 = vmatprep.subr.bf16.mxu0 0
    %2458 = vmatpush1.bf16.msra.mxu0 %v1811
    %2459 = vmatprep.subr.bf16.mxu0 0
    %2460 = vmatpush1.bf16.msra.mxu0 %v1812
    %2461 = vmatprep.mubr.bf16.mxu0 %v640
    %2462 = vmatmul.mubr.bf16.gmra.mrb[0].mxu0 %v639
    %v2463 = vpop.f32.mrb[0].mxu0
    %v2464 = vadd.f32 %v2424, %v2463
    %v2465 = vpop.f32.mrb[0].mxu0
    %v2466 = vpop.f32.mrb[0].mxu0
    %v2467 = vpop.f32.mrb[0].mxu0
    %2468 = vdwg.mxu0
    %2469 = vmatprep.subr.bf16.mxu0 0
    %2470 = vmatpush1.bf16.msra.mxu0 %v1813
    %2471 = vmatprep.subr.bf16.mxu0 0
    %2472 = vmatpush1.bf16.msra.mxu0 %v1814
    %2473 = vmatprep.subr.bf16.mxu0 0
    %2474 = vmatpush1.bf16.msra.mxu0 %v1815
    %2475 = vmatprep.subr.bf16.mxu0 0
    %2476 = vmatpush1.bf16.msra.mxu0 %v1816
    %2477 = vmatprep.subr.bf16.mxu0 0
    %2478 = vmatpush1.bf16.msra.mxu0 %v1817
    %2479 = vmatprep.subr.bf16.mxu0 0
    %2480 = vmatpush1.bf16.msra.mxu0 %v1818
    %2481 = vmatprep.subr.bf16.mxu0 0
    %2482 = vmatpush1.bf16.msra.mxu0 %v1819
    %2483 = vmatprep.subr.bf16.mxu0 0
    %2484 = vmatpush1.bf16.msra.mxu0 %v1820
    %2485 = vmatprep.subr.bf16.mxu0 0
    %2486 = vmatpush1.bf16.msra.mxu0 %v1821
    %2487 = vmatprep.subr.bf16.mxu0 0
    %2488 = vmatpush1.bf16.msra.mxu0 %v1822
    %2489 = vmatprep.subr.bf16.mxu0 0
    %2490 = vmatpush1.bf16.msra.mxu0 %v1823
    %2491 = vmatprep.subr.bf16.mxu0 0
    %2492 = vmatpush1.bf16.msra.mxu0 %v1824
    %2493 = vmatprep.subr.bf16.mxu0 0
    %2494 = vmatpush1.bf16.msra.mxu0 %v1825
    %2495 = vmatprep.subr.bf16.mxu0 0
    %2496 = vmatpush1.bf16.msra.mxu0 %v1826
    %2497 = vmatprep.subr.bf16.mxu0 0
    %2498 = vmatpush1.bf16.msra.mxu0 %v1827
    %2499 = vmatprep.subr.bf16.mxu0 0
    %2500 = vmatpush1.bf16.msra.mxu0 %v1828
    %2501 = vmatprep.mubr.bf16.mxu0 %v642
    %2502 = vmatmul.mubr.bf16.gmra.mrb[0].mxu0 %v641
    %v2503 = vpop.f32.mrb[0].mxu0
    %v2504 = vadd.f32 %v2464, %v2503
    %v2505 = vpop.f32.mrb[0].mxu0
    %v2506 = vpop.f32.mrb[0].mxu0
    %v2507 = vpop.f32.mrb[0].mxu0
    %2508 = vdwg.mxu0
    %2509 = vmatprep.subr.bf16.mxu0 0
    %2510 = vmatpush1.bf16.msra.mxu0 %v1829
    %2511 = vmatprep.subr.bf16.mxu0 0
    %2512 = vmatpush1.bf16.msra.mxu0 %v1830
    %2513 = vmatprep.subr.bf16.mxu0 0
    %2514 = vmatpush1.bf16.msra.mxu0 %v1831
    %2515 = vmatprep.subr.bf16.mxu0 0
    %2516 = vmatpush1.bf16.msra.mxu0 %v1832
    %2517 = vmatprep.subr.bf16.mxu0 0
    %2518 = vmatpush1.bf16.msra.mxu0 %v1833
    %2519 = vmatprep.subr.bf16.mxu0 0
    %2520 = vmatpush1.bf16.msra.mxu0 %v1834
    %2521 = vmatprep.subr.bf16.mxu0 0
    %2522 = vmatpush1.bf16.msra.mxu0 %v1835
    %2523 = vmatprep.subr.bf16.mxu0 0
    %2524 = vmatpush1.bf16.msra.mxu0 %v1836
    %2525 = vmatprep.subr.bf16.mxu0 0
    %2526 = vmatpush1.bf16.msra.mxu0 %v1837
    %2527 = vmatprep.subr.bf16.mxu0 0
    %2528 = vmatpush1.bf16.msra.mxu0 %v1838
    %2529 = vmatprep.subr.bf16.mxu0 0
    %2530 = vmatpush1.bf16.msra.mxu0 %v1839
    %2531 = vmatprep.subr.bf16.mxu0 0
    %2532 = vmatpush1.bf16.msra.mxu0 %v1840
    %2533 = vmatprep.subr.bf16.mxu0 0
    %2534 = vmatpush1.bf16.msra.mxu0 %v1841
    %2535 = vmatprep.subr.bf16.mxu0 0
    %2536 = vmatpush1.bf16.msra.mxu0 %v1842
    %2537 = vmatprep.subr.bf16.mxu0 0
    %2538 = vmatpush1.bf16.msra.mxu0 %v1843
    %2539 = vmatprep.subr.bf16.mxu0 0
    %2540 = vmatpush1.bf16.msra.mxu0 %v1844
    %2541 = vmatprep.mubr.bf16.mxu0 %v644
    %2542 = vmatmul.mubr.bf16.gmra.mrb[0].mxu0 %v643
    %v2543 = vpop.f32.mrb[0].mxu0
    %v2544 = vadd.f32 %v2504, %v2543
    %v2545 = vpop.f32.mrb[0].mxu0
    %v2546 = vpop.f32.mrb[0].mxu0
    %v2547 = vpop.f32.mrb[0].mxu0
    %2548 = vdwg.mxu0
    %2549 = vmatprep.subr.bf16.mxu0 0
    %2550 = vmatpush1.bf16.msra.mxu0 %v1845
    %2551 = vmatprep.subr.bf16.mxu0 0
    %2552 = vmatpush1.bf16.msra.mxu0 %v1846
    %2553 = vmatprep.subr.bf16.mxu0 0
    %2554 = vmatpush1.bf16.msra.mxu0 %v1847
    %2555 = vmatprep.subr.bf16.mxu0 0
    %2556 = vmatpush1.bf16.msra.mxu0 %v1848
    %2557 = vmatprep.subr.bf16.mxu0 0
    %2558 = vmatpush1.bf16.msra.mxu0 %v1849
    %2559 = vmatprep.subr.bf16.mxu0 0
    %2560 = vmatpush1.bf16.msra.mxu0 %v1850
    %2561 = vmatprep.subr.bf16.mxu0 0
    %2562 = vmatpush1.bf16.msra.mxu0 %v1851
    %2563 = vmatprep.subr.bf16.mxu0 0
    %2564 = vmatpush1.bf16.msra.mxu0 %v1852
    %2565 = vmatprep.subr.bf16.mxu0 0
    %2566 = vmatpush1.bf16.msra.mxu0 %v1853
    %2567 = vmatprep.subr.bf16.mxu0 0
    %2568 = vmatpush1.bf16.msra.mxu0 %v1854
    %2569 = vmatprep.subr.bf16.mxu0 0
    %2570 = vmatpush1.bf16.msra.mxu0 %v1855
    %2571 = vmatprep.subr.bf16.mxu0 0
    %2572 = vmatpush1.bf16.msra.mxu0 %v1856
    %2573 = vmatprep.subr.bf16.mxu0 0
    %2574 = vmatpush1.bf16.msra.mxu0 %v1857
    %2575 = vmatprep.subr.bf16.mxu0 0
    %2576 = vmatpush1.bf16.msra.mxu0 %v1858
    %2577 = vmatprep.subr.bf16.mxu0 0
    %2578 = vmatpush1.bf16.msra.mxu0 %v1859
    %2579 = vmatprep.subr.bf16.mxu0 0
    %2580 = vmatpush1.bf16.msra.mxu0 %v1860
    %2581 = vmatprep.mubr.bf16.mxu0 %v646
    %2582 = vmatmul.mubr.bf16.gmra.mrb[0].mxu0 %v645
    %v2583 = vpop.f32.mrb[0].mxu0
    %v2584 = vadd.f32 %v2544, %v2583
    %v2585 = vpop.f32.mrb[0].mxu0
    %v2586 = vpop.f32.mrb[0].mxu0
    %v2587 = vpop.f32.mrb[0].mxu0
    %2588 = vdwg.mxu0
    %2589 = vmatprep.subr.bf16.mxu0 0
    %2590 = vmatpush1.bf16.msra.mxu0 %v1861
    %2591 = vmatprep.subr.bf16.mxu0 0
    %2592 = vmatpush1.bf16.msra.mxu0 %v1862
    %2593 = vmatprep.subr.bf16.mxu0 0
    %2594 = vmatpush1.bf16.msra.mxu0 %v1863
    %2595 = vmatprep.subr.bf16.mxu0 0
    %2596 = vmatpush1.bf16.msra.mxu0 %v1864
    %2597 = vmatprep.subr.bf16.mxu0 0
    %2598 = vmatpush1.bf16.msra.mxu0 %v1865
    %2599 = vmatprep.subr.bf16.mxu0 0
    %2600 = vmatpush1.bf16.msra.mxu0 %v1866
    %2601 = vmatprep.subr.bf16.mxu0 0
    %2602 = vmatpush1.bf16.msra.mxu0 %v1867
    %2603 = vmatprep.subr.bf16.mxu0 0
    %2604 = vmatpush1.bf16.msra.mxu0 %v1868
    %2605 = vmatprep.subr.bf16.mxu0 0
    %2606 = vmatpush1.bf16.msra.mxu0 %v1869
    %2607 = vmatprep.subr.bf16.mxu0 0
    %2608 = vmatpush1.bf16.msra.mxu0 %v1870
    %2609 = vmatprep.subr.bf16.mxu0 0
    %2610 = vmatpush1.bf16.msra.mxu0 %v1871
    %2611 = vmatprep.subr.bf16.mxu0 0
    %2612 = vmatpush1.bf16.msra.mxu0 %v1872
    %2613 = vmatprep.subr.bf16.mxu0 0
    %2614 = vmatpush1.bf16.msra.mxu0 %v1873
    %2615 = vmatprep.subr.bf16.mxu0 0
    %2616 = vmatpush1.bf16.msra.mxu0 %v1874
    %2617 = vmatprep.subr.bf16.mxu0 0
    %2618 = vmatpush1.bf16.msra.mxu0 %v1875
    %2619 = vmatprep.subr.bf16.mxu0 0
    %2620 = vmatpush1.bf16.msra.mxu0 %v1876
    %2621 = vmatprep.mubr.bf16.mxu0 %v648
    %2622 = vmatmul.mubr.bf16.gmra.mrb[0].mxu0 %v647
    %v2623 = vpop.f32.mrb[0].mxu0
    %v2624 = vadd.f32 %v2584, %v2623
    %v2625 = vpop.f32.mrb[0].mxu0
    %v2626 = vpop.f32.mrb[0].mxu0
    %v2627 = vpop.f32.mrb[0].mxu0
    %2628 = vdwg.mxu0
    %2629 = vmatprep.subr.bf16.mxu0 0
    %2630 = vmatpush1.bf16.msra.mxu0 %v1877
    %2631 = vmatprep.subr.bf16.mxu0 0
    %2632 = vmatpush1.bf16.msra.mxu0 %v1878
    %2633 = vmatprep.subr.bf16.mxu0 0
    %2634 = vmatpush1.bf16.msra.mxu0 %v1879
    %2635 = vmatprep.subr.bf16.mxu0 0
    %2636 = vmatpush1.bf16.msra.mxu0 %v1880
    %2637 = vmatprep.subr.bf16.mxu0 0
    %2638 = vmatpush1.bf16.msra.mxu0 %v1881
    %2639 = vmatprep.subr.bf16.mxu0 0
    %2640 = vmatpush1.bf16.msra.mxu0 %v1882
    %2641 = vmatprep.subr.bf16.mxu0 0
    %2642 = vmatpush1.bf16.msra.mxu0 %v1883
    %2643 = vmatprep.subr.bf16.mxu0 0
    %2644 = vmatpush1.bf16.msra.mxu0 %v1884
    %2645 = vmatprep.subr.bf16.mxu0 0
    %2646 = vmatpush1.bf16.msra.mxu0 %v1885
    %2647 = vmatprep.subr.bf16.mxu0 0
    %2648 = vmatpush1.bf16.msra.mxu0 %v1886
    %2649 = vmatprep.subr.bf16.mxu0 0
    %2650 = vmatpush1.bf16.msra.mxu0 %v1887
    %2651 = vmatprep.subr.bf16.mxu0 0
    %2652 = vmatpush1.bf16.msra.mxu0 %v1888
    %2653 = vmatprep.subr.bf16.mxu0 0
    %2654 = vmatpush1.bf16.msra.mxu0 %v1889
    %2655 = vmatprep.subr.bf16.mxu0 0
    %2656 = vmatpush1.bf16.msra.mxu0 %v1890
    %2657 = vmatprep.subr.bf16.mxu0 0
    %2658 = vmatpush1.bf16.msra.mxu0 %v1891
    %2659 = vmatprep.subr.bf16.mxu0 0
    %2660 = vmatpush1.bf16.msra.mxu0 %v1892
    %2661 = vmatprep.mubr.bf16.mxu0 %v650
    %2662 = vmatmul.mubr.bf16.gmra.mrb[0].mxu0 %v649
    %v2663 = vpop.f32.mrb[0].mxu0
    %v2664 = vadd.f32 %v2624, %v2663
    %v2665 = vpop.f32.mrb[0].mxu0
    %v2666 = vpop.f32.mrb[0].mxu0
    %v2667 = vpop.f32.mrb[0].mxu0
    %2668 = vdwg.mxu0
    %2669 = vmatprep.subr.bf16.mxu0 0
    %2670 = vmatpush1.bf16.msra.mxu0 %v1893
    %2671 = vmatprep.subr.bf16.mxu0 0
    %2672 = vmatpush1.bf16.msra.mxu0 %v1894
    %2673 = vmatprep.subr.bf16.mxu0 0
    %2674 = vmatpush1.bf16.msra.mxu0 %v1895
    %2675 = vmatprep.subr.bf16.mxu0 0
    %2676 = vmatpush1.bf16.msra.mxu0 %v1896
    %2677 = vmatprep.subr.bf16.mxu0 0
    %2678 = vmatpush1.bf16.msra.mxu0 %v1897
    %2679 = vmatprep.subr.bf16.mxu0 0
    %2680 = vmatpush1.bf16.msra.mxu0 %v1898
    %2681 = vmatprep.subr.bf16.mxu0 0
    %2682 = vmatpush1.bf16.msra.mxu0 %v1899
    %2683 = vmatprep.subr.bf16.mxu0 0
    %2684 = vmatpush1.bf16.msra.mxu0 %v1900
    %2685 = vmatprep.subr.bf16.mxu0 0
    %2686 = vmatpush1.bf16.msra.mxu0 %v1901
    %2687 = vmatprep.subr.bf16.mxu0 0
    %2688 = vmatpush1.bf16.msra.mxu0 %v1902
    %2689 = vmatprep.subr.bf16.mxu0 0
    %2690 = vmatpush1.bf16.msra.mxu0 %v1903
    %2691 = vmatprep.subr.bf16.mxu0 0
    %2692 = vmatpush1.bf16.msra.mxu0 %v1904
    %2693 = vmatprep.subr.bf16.mxu0 0
    %2694 = vmatpush1.bf16.msra.mxu0 %v1905
    %2695 = vmatprep.subr.bf16.mxu0 0
    %2696 = vmatpush1.bf16.msra.mxu0 %v1906
    %2697 = vmatprep.subr.bf16.mxu0 0
    %2698 = vmatpush1.bf16.msra.mxu0 %v1907
    %2699 = vmatprep.subr.bf16.mxu0 0
    %2700 = vmatpush1.bf16.msra.mxu0 %v1908
    %2701 = vmatprep.mubr.bf16.mxu0 %v652
    %2702 = vmatmul.mubr.bf16.gmra.mrb[0].mxu0 %v651
    %v2703 = vpop.f32.mrb[0].mxu0
    %v2704 = vadd.f32 %v2664, %v2703
    %v2705 = vpop.f32.mrb[0].mxu0
    %v2706 = vpop.f32.mrb[0].mxu0
    %v2707 = vpop.f32.mrb[0].mxu0
    %2708 = vdwg.mxu0
    %2709 = vmatprep.subr.bf16.mxu0 0
    %2710 = vmatpush1.bf16.msra.mxu0 %v1909
    %2711 = vmatprep.subr.bf16.mxu0 0
    %2712 = vmatpush1.bf16.msra.mxu0 %v1910
    %2713 = vmatprep.subr.bf16.mxu0 0
    %2714 = vmatpush1.bf16.msra.mxu0 %v1911
    %2715 = vmatprep.subr.bf16.mxu0 0
    %2716 = vmatpush1.bf16.msra.mxu0 %v1912
    %2717 = vmatprep.subr.bf16.mxu0 0
    %2718 = vmatpush1.bf16.msra.mxu0 %v1913
    %2719 = vmatprep.subr.bf16.mxu0 0
    %2720 = vmatpush1.bf16.msra.mxu0 %v1914
    %2721 = vmatprep.subr.bf16.mxu0 0
    %2722 = vmatpush1.bf16.msra.mxu0 %v1915
    %2723 = vmatprep.subr.bf16.mxu0 0
    %2724 = vmatpush1.bf16.msra.mxu0 %v1916
    %2725 = vmatprep.subr.bf16.mxu0 0
    %2726 = vmatpush1.bf16.msra.mxu0 %v1917
    %2727 = vmatprep.subr.bf16.mxu0 0
    %2728 = vmatpush1.bf16.msra.mxu0 %v1918
    %2729 = vmatprep.subr.bf16.mxu0 0
    %2730 = vmatpush1.bf16.msra.mxu0 %v1919
    %2731 = vmatprep.subr.bf16.mxu0 0
    %2732 = vmatpush1.bf16.msra.mxu0 %v1920
    %2733 = vmatprep.subr.bf16.mxu0 0
    %2734 = vmatpush1.bf16.msra.mxu0 %v1921
    %2735 = vmatprep.subr.bf16.mxu0 0
    %2736 = vmatpush1.bf16.msra.mxu0 %v1922
    %2737 = vmatprep.subr.bf16.mxu0 0
    %2738 = vmatpush1.bf16.msra.mxu0 %v1923
    %2739 = vmatprep.subr.bf16.mxu0 0
    %2740 = vmatpush1.bf16.msra.mxu0 %v1924
    %2741 = vmatprep.mubr.bf16.mxu0 %v654
    %2742 = vmatmul.mubr.bf16.gmra.mrb[0].mxu0 %v653
    %v2743 = vpop.f32.mrb[0].mxu0
    %v2744 = vadd.f32 %v2704, %v2743
    %v2745 = vpop.f32.mrb[0].mxu0
    %v2746 = vpop.f32.mrb[0].mxu0
    %v2747 = vpop.f32.mrb[0].mxu0
    %2748 = vdwg.mxu0
    %2749 = vmatprep.subr.bf16.mxu0 0
    %2750 = vmatpush1.bf16.msra.mxu0 %v1925
    %2751 = vmatprep.subr.bf16.mxu0 0
    %2752 = vmatpush1.bf16.msra.mxu0 %v1926
    %2753 = vmatprep.subr.bf16.mxu0 0
    %2754 = vmatpush1.bf16.msra.mxu0 %v1927
    %2755 = vmatprep.subr.bf16.mxu0 0
    %2756 = vmatpush1.bf16.msra.mxu0 %v1928
    %2757 = vmatprep.subr.bf16.mxu0 0
    %2758 = vmatpush1.bf16.msra.mxu0 %v1929
    %2759 = vmatprep.subr.bf16.mxu0 0
    %2760 = vmatpush1.bf16.msra.mxu0 %v1930
    %2761 = vmatprep.subr.bf16.mxu0 0
    %2762 = vmatpush1.bf16.msra.mxu0 %v1931
    %2763 = vmatprep.subr.bf16.mxu0 0
    %2764 = vmatpush1.bf16.msra.mxu0 %v1932
    %2765 = vmatprep.subr.bf16.mxu0 0
    %2766 = vmatpush1.bf16.msra.mxu0 %v1933
    %2767 = vmatprep.subr.bf16.mxu0 0
    %2768 = vmatpush1.bf16.msra.mxu0 %v1934
    %2769 = vmatprep.subr.bf16.mxu0 0
    %2770 = vmatpush1.bf16.msra.mxu0 %v1935
    %2771 = vmatprep.subr.bf16.mxu0 0
    %2772 = vmatpush1.bf16.msra.mxu0 %v1936
    %2773 = vmatprep.subr.bf16.mxu0 0
    %2774 = vmatpush1.bf16.msra.mxu0 %v1937
    %2775 = vmatprep.subr.bf16.mxu0 0
    %2776 = vmatpush1.bf16.msra.mxu0 %v1938
    %2777 = vmatprep.subr.bf16.mxu0 0
    %2778 = vmatpush1.bf16.msra.mxu0 %v1939
    %2779 = vmatprep.subr.bf16.mxu0 0
    %2780 = vmatpush1.bf16.msra.mxu0 %v1940
    %2781 = vmatprep.mubr.bf16.mxu0 %v656
    %2782 = vmatmul.mubr.bf16.gmra.mrb[0].mxu0 %v655
    %v2783 = vpop.f32.mrb[0].mxu0
    %v2784 = vadd.f32 %v2744, %v2783
    %v2785 = vpop.f32.mrb[0].mxu0
    %v2786 = vpop.f32.mrb[0].mxu0
    %v2787 = vpop.f32.mrb[0].mxu0
    %2788 = vdwg.mxu0
    %2789 = vmatprep.subr.bf16.mxu0 0
    %2790 = vmatpush1.bf16.msra.mxu0 %v1941
    %2791 = vmatprep.subr.bf16.mxu0 0
    %2792 = vmatpush1.bf16.msra.mxu0 %v1942
    %2793 = vmatprep.subr.bf16.mxu0 0
    %2794 = vmatpush1.bf16.msra.mxu0 %v1943
    %2795 = vmatprep.subr.bf16.mxu0 0
    %2796 = vmatpush1.bf16.msra.mxu0 %v1944
    %2797 = vmatprep.subr.bf16.mxu0 0
    %2798 = vmatpush1.bf16.msra.mxu0 %v1945
    %2799 = vmatprep.subr.bf16.mxu0 0
    %2800 = vmatpush1.bf16.msra.mxu0 %v1946
    %2801 = vmatprep.subr.bf16.mxu0 0
    %2802 = vmatpush1.bf16.msra.mxu0 %v1947
    %2803 = vmatprep.subr.bf16.mxu0 0
    %2804 = vmatpush1.bf16.msra.mxu0 %v1948
    %2805 = vmatprep.subr.bf16.mxu0 0
    %2806 = vmatpush1.bf16.msra.mxu0 %v1949
    %2807 = vmatprep.subr.bf16.mxu0 0
    %2808 = vmatpush1.bf16.msra.mxu0 %v1950
    %2809 = vmatprep.subr.bf16.mxu0 0
    %2810 = vmatpush1.bf16.msra.mxu0 %v1951
    %2811 = vmatprep.subr.bf16.mxu0 0
    %2812 = vmatpush1.bf16.msra.mxu0 %v1952
    %2813 = vmatprep.subr.bf16.mxu0 0
    %2814 = vmatpush1.bf16.msra.mxu0 %v1953
    %2815 = vmatprep.subr.bf16.mxu0 0
    %2816 = vmatpush1.bf16.msra.mxu0 %v1954
    %2817 = vmatprep.subr.bf16.mxu0 0
    %2818 = vmatpush1.bf16.msra.mxu0 %v1955
    %2819 = vmatprep.subr.bf16.mxu0 0
    %2820 = vmatpush1.bf16.msra.mxu0 %v1956
    %2821 = vmatprep.mubr.bf16.mxu0 %v658
    %2822 = vmatmul.mubr.bf16.gmra.mrb[0].mxu0 %v657
    %v2823 = vpop.f32.mrb[0].mxu0
    %v2824 = vadd.f32 %v2784, %v2823
    %v2825 = vpop.f32.mrb[0].mxu0
    %v2826 = vpop.f32.mrb[0].mxu0
    %v2827 = vpop.f32.mrb[0].mxu0
    %2828 = vdwg.mxu0
    %2829 = vmatprep.subr.bf16.mxu0 0
    %2830 = vmatpush1.bf16.msra.mxu0 %v1957
    %2831 = vmatprep.subr.bf16.mxu0 0
    %2832 = vmatpush1.bf16.msra.mxu0 %v1958
    %2833 = vmatprep.subr.bf16.mxu0 0
    %2834 = vmatpush1.bf16.msra.mxu0 %v1959
    %2835 = vmatprep.subr.bf16.mxu0 0
    %2836 = vmatpush1.bf16.msra.mxu0 %v1960
    %2837 = vmatprep.subr.bf16.mxu0 0
    %2838 = vmatpush1.bf16.msra.mxu0 %v1961
    %2839 = vmatprep.subr.bf16.mxu0 0
    %2840 = vmatpush1.bf16.msra.mxu0 %v1962
    %2841 = vmatprep.subr.bf16.mxu0 0
    %2842 = vmatpush1.bf16.msra.mxu0 %v1963
    %2843 = vmatprep.subr.bf16.mxu0 0
    %2844 = vmatpush1.bf16.msra.mxu0 %v1964
    %2845 = vmatprep.subr.bf16.mxu0 0
    %2846 = vmatpush1.bf16.msra.mxu0 %v1965
    %2847 = vmatprep.subr.bf16.mxu0 0
    %2848 = vmatpush1.bf16.msra.mxu0 %v1966
    %2849 = vmatprep.subr.bf16.mxu0 0
    %2850 = vmatpush1.bf16.msra.mxu0 %v1967
    %2851 = vmatprep.subr.bf16.mxu0 0
    %2852 = vmatpush1.bf16.msra.mxu0 %v1968
    %2853 = vmatprep.subr.bf16.mxu0 0
    %2854 = vmatpush1.bf16.msra.mxu0 %v1969
    %2855 = vmatprep.subr.bf16.mxu0 0
    %2856 = vmatpush1.bf16.msra.mxu0 %v1970
    %2857 = vmatprep.subr.bf16.mxu0 0
    %2858 = vmatpush1.bf16.msra.mxu0 %v1971
    %2859 = vmatprep.subr.bf16.mxu0 0
    %2860 = vmatpush1.bf16.msra.mxu0 %v1972
    %2861 = vmatprep.mubr.bf16.mxu0 %v660
    %2862 = vmatmul.mubr.bf16.gmra.mrb[0].mxu0 %v659
    %v2863 = vpop.f32.mrb[0].mxu0
    %v2864 = vadd.f32 %v2824, %v2863
    %v2865 = vpop.f32.mrb[0].mxu0
    %v2866 = vpop.f32.mrb[0].mxu0
    %v2867 = vpop.f32.mrb[0].mxu0
    %2868 = vdwg.mxu0
    %s2869 = sld [smem:[#allocation2]]
    %vm2870 = vcmp.gt.f32.partialorder %v2864, 0.0
    %v2871 = vstv %s2869
    %v2872 = vmul.f32 %v2871, %v2864
    %v2873 = vsel %vm2870, %v2864, %v2872
    %2874 = vst [vmem:[#allocation8] sm:$0xff] %v2873
    // Predicated region
    $region26: #{tpu_custom_call.1} parent=1 // pred_check
      _
    $region27: #{tpu_custom_call.1} parent=1 // pred_check_branch
      %2876 = sbr.rel (0) target = $region29
    $region28: #{tpu_custom_call.1} parent=1 // pred_region
      %s2878 = ssub.s32 128, 128
      %2879 = vsyncadd [#allocation5], %s2878
      %s2881 = sshll.u32 [#allocation8], 4
      %s2882 = int_to_ptr.vmem [resolvable:$true] %s2881
      %2884 = dma.vmem_to_hbm [thread:$0]  %s2882, 128, %s4, [#allocation5]
    $region29: #{tpu_custom_call.1} parent=1 // pred_fallthru
      _
    // Predicated region
    $region30: #{tpu_custom_call.1} parent=1 // pred_check
      _
    $region31: #{tpu_custom_call.1} parent=1 // pred_check_branch
      %2886 = sbr.rel (0) target = $region33
    $region32: #{tpu_custom_call.1} parent=1 // pred_region
      %2887 = dma.done [#allocation5], 128
    $region33: #{tpu_custom_call.1} parent=1 // pred_fallthru
      _
    %2888 = vsyncpa [#allocation4], 1
    %2889 = vsyncpa [#allocation7], 1
    %2890 = vsyncpa [#allocation5], 1

</llo_original>
